<compile_context>
chip_gen: v5e
topology: v5e:2x2
jax: 0.10.0
libtpu: 0.0.40
codegen_flags: <defaults>
</compile_context>

<pallas_src>
import functools

import jax
import jax.numpy as jnp
from jax.experimental import pallas as pl
from jax.experimental.pallas import tpu as pltpu

_LANE = 128
_TILE_TARGET = 2048                 # bf16 A tile at 2048x2048 = 8 MiB (x2 buffers)
_VMEM_LIMIT = 32 * 1024 * 1024      # explicit scoped-VMEM budget; safe on v5e/v6e/v7x


def _round_up(x, m):
    return ((x + m - 1) // m) * m


def _choose_tile(n_pad, target):
    """Largest 128-multiple divisor of n_pad that is <= target.

    Prefers a divisor leaving >= 2 row tiles so the 'parallel' grid axis can
    shard across both v7x TensorCores.  Divisor-of-n_pad guarantees padding
    waste is only the 128 alignment, never a whole tile.
    """
    m = n_pad // _LANE
    best_any, best_multi = _LANE, None
    for t in range(1, m + 1):
        tile = t * _LANE
        if tile > target:
            break
        if m % t == 0:
            best_any = tile
            if m // t >= 2:
                best_multi = tile
    return best_multi if best_multi is not None else best_any


# ----------------------------------------------------------------------------
# Kernel 1: row-tiled scaled projection  P = Dinv @ (X @ W)
# ----------------------------------------------------------------------------
def _proj_kernel(x_ref, w_ref, dinv_ref, o_ref):
    p = jnp.dot(x_ref[...], w_ref[...], preferred_element_type=jnp.float32)
    o_ref[...] = (dinv_ref[...] * p).astype(o_ref.dtype)


def _project_scaled(x_bf16, w_bf16, dinv_col, tm):
    n_pad, d_pad = x_bf16.shape
    f_pad = w_bf16.shape[1]
    return pl.pallas_call(
        _proj_kernel,
        out_shape=jax.ShapeDtypeStruct((n_pad, f_pad), jnp.bfloat16),
        grid=(n_pad // tm,),
        in_specs=[
            pl.BlockSpec((tm, d_pad), lambda i: (i, 0)),
            pl.BlockSpec((d_pad, f_pad), lambda i: (0, 0)),   # W resident
            pl.BlockSpec((tm, 1), lambda i: (i, 0)),           # dinv row block
        ],
        out_specs=pl.BlockSpec((tm, f_pad), lambda i: (i, 0)),
        compiler_params=pltpu.CompilerParams(
            dimension_semantics=("parallel",),
            vmem_limit_bytes=_VMEM_LIMIT,
        ),
    )(x_bf16, w_bf16, dinv_col)


# ----------------------------------------------------------------------------
# Kernel 2 (layer 1, fused): streams (A+I) tiles;   acc = (A+I) @ P1
#   epilogue:  H = ReLU(Dinv*acc + b1);  out = (Dinv * (H @ W2)) as bf16
# ----------------------------------------------------------------------------
def _agg_fused_kernel(a_ref, p_ref, dinv_ref, b_ref, w2_ref, o_ref, acc_ref):
    k = pl.program_id(1)

    @pl.when(k == 0)
    def _():
        acc_ref[...] = jnp.zeros_like(acc_ref)

    acc_ref[...] += jnp.dot(
        a_ref[...], p_ref[...], preferred_element_type=jnp.float32)

    @pl.when(k == pl.num_programs(1) - 1)
    def _():
        h = jnp.maximum(dinv_ref[...] * acc_ref[...] + b_ref[...], 0.0)
        hw = jnp.dot(h.astype(jnp.bfloat16), w2_ref[...],
                     preferred_element_type=jnp.float32)
        o_ref[...] = (dinv_ref[...] * hw).astype(o_ref.dtype)   # bf16 P2


def _aggregate_fused(adj_bf16, p1_bf16, dinv_col, bias_row, w2_bf16, tm, tk):
    n_pad = adj_bf16.shape[0]
    h_pad = p1_bf16.shape[1]
    c_pad = w2_bf16.shape[1]
    return pl.pallas_call(
        _agg_fused_kernel,
        out_shape=jax.ShapeDtypeStruct((n_pad, c_pad), jnp.bfloat16),
        grid=(n_pad // tm, n_pad // tk),
        in_specs=[
            pl.BlockSpec((tm, tk), lambda i, k: (i, k)),        # (A+I) tile
            pl.BlockSpec((tk, h_pad), lambda i, k: (k, 0)),     # matching P1 slab
            pl.BlockSpec((tm, 1), lambda i, k: (i, 0)),         # dinv row block
            pl.BlockSpec((1, h_pad), lambda i, k: (0, 0)),      # b1 (resident)
            pl.BlockSpec((h_pad, c_pad), lambda i, k: (0, 0)),  # W2 (resident)
        ],
        out_specs=pl.BlockSpec((tm, c_pad), lambda i, k: (i, 0)),
        scratch_shapes=[pltpu.VMEM((tm, h_pad), jnp.float32)],
        compiler_params=pltpu.CompilerParams(
            dimension_semantics=("parallel", "arbitrary"),
            vmem_limit_bytes=_VMEM_LIMIT,
        ),
    )(adj_bf16, p1_bf16, dinv_col, bias_row, w2_bf16)


# ----------------------------------------------------------------------------
# Kernel 3 (layer 2):  logits = Dinv * ((A+I) @ P2) + b2
# ----------------------------------------------------------------------------
def _agg_final_kernel(a_ref, p_ref, dinv_ref, b_ref, o_ref, acc_ref):
    k = pl.program_id(1)

    @pl.when(k == 0)
    def _():
        acc_ref[...] = jnp.zeros_like(acc_ref)

    acc_ref[...] += jnp.dot(
        a_ref[...], p_ref[...], preferred_element_type=jnp.float32)

    @pl.when(k == pl.num_programs(1) - 1)
    def _():
        o_ref[...] = (dinv_ref[...] * acc_ref[...] + b_ref[...]).astype(o_ref.dtype)


def _aggregate_final(adj_bf16, p2_bf16, dinv_col, bias_row, tm, tk):
    n_pad = adj_bf16.shape[0]
    c_pad = p2_bf16.shape[1]
    return pl.pallas_call(
        _agg_final_kernel,
        out_shape=jax.ShapeDtypeStruct((n_pad, c_pad), jnp.float32),
        grid=(n_pad // tm, n_pad // tk),
        in_specs=[
            pl.BlockSpec((tm, tk), lambda i, k: (i, k)),
            pl.BlockSpec((tk, c_pad), lambda i, k: (k, 0)),
            pl.BlockSpec((tm, 1), lambda i, k: (i, 0)),
            pl.BlockSpec((1, c_pad), lambda i, k: (0, 0)),
        ],
        out_specs=pl.BlockSpec((tm, c_pad), lambda i, k: (i, 0)),
        scratch_shapes=[pltpu.VMEM((tm, c_pad), jnp.float32)],
        compiler_params=pltpu.CompilerParams(
            dimension_semantics=("parallel", "arbitrary"),
            vmem_limit_bytes=_VMEM_LIMIT,
        ),
    )(adj_bf16, p2_bf16, dinv_col, bias_row)


# ----------------------------------------------------------------------------
# Forward pass:  logits = GCN2(x, edge_index)
# ----------------------------------------------------------------------------
def neco_forward(x, edge_index, params):
    """Neco.forward(dataset, device, logit=True) -> logits, via Pallas kernels.

    x:          [N, d]  float32 node features
    edge_index: [2, E]  int32 COO edges (PyG convention: row=src, col=dst)
    params:     dict with w1 [d,H], b1 [H], w2 [H,C], b2 [C]
    """
    n, d = x.shape
    w1, b1, w2, b2 = params["w1"], params["b1"], params["w2"], params["b2"]
    hidden, c = w1.shape[1], w2.shape[1]

    # ---- padding / tile geometry (lane-dense, divisor tiles) ------------------
    n_pad = _round_up(n, _LANE)
    d_pad = _round_up(d, _LANE)
    h_pad = _round_up(hidden, _LANE)
    c_pad = _round_up(c, _LANE)

    tm = _choose_tile(n_pad, _TILE_TARGET)     # aggregation row tile
    tk = tm                                    # aggregation K (column) tile
    # projection row tile: cap so the (tp, d_pad) bf16 X tile stays ~<= 4 MiB
    proj_target = min(_TILE_TARGET,
                      max(_LANE, ((4 << 20) // max(2 * d_pad, 1)) // _LANE * _LANE))
    tp = _choose_tile(n_pad, proj_target)

    # ---- glue: (A + remaining self loops) built ONCE, straight into a padded
    #      bf16 buffer.  Normalization (D^-1/2) is applied inside the kernels.
    src, dst = edge_index[0], edge_index[1]
    adj = jnp.zeros((n_pad, n_pad), jnp.bfloat16)
    adj = adj.at[dst, src].add(jnp.ones(src.shape, jnp.bfloat16))   # dup edges sum
    idx = jnp.arange(n)
    diag = adj[idx, idx]
    missing = jnp.where(diag > 0, 0.0, 1.0).astype(jnp.bfloat16)
    adj = adj.at[idx, idx].add(missing)                             # add *remaining* self loops
    deg = jnp.sum(adj, axis=1, dtype=jnp.float32)                   # in-degree incl. self loop
    dinv = jnp.where(deg > 0.0, jax.lax.rsqrt(deg), 0.0)            # padded rows -> 0
    dinv_col = dinv.reshape(n_pad, 1)

    # ---- pad + cast the small operands ----------------------------------------
    x_p = jnp.pad(x, ((0, n_pad - n), (0, d_pad - d))).astype(jnp.bfloat16)
    w1_p = jnp.pad(w1, ((0, d_pad - d), (0, h_pad - hidden))).astype(jnp.bfloat16)
    w2_p = jnp.pad(w2, ((0, h_pad - hidden), (0, c_pad - c))).astype(jnp.bfloat16)
    b1_p = jnp.pad(b1, (0, h_pad - hidden)).reshape(1, h_pad).astype(jnp.float32)
    b2_p = jnp.pad(b2, (0, c_pad - c)).reshape(1, c_pad).astype(jnp.float32)

    # ---- layer 1 (+ fused layer-2 projection) ----------------------------------
    #   P1 = Dinv (X W1);  acc = (A+I) P1;  H = relu(Dinv acc + b1);  P2 = Dinv (H W2)
    p1 = _project_scaled(x_p, w1_p, dinv_col, tp)              # [n_pad, h_pad] bf16
    p2 = _aggregate_fused(adj, p1, dinv_col, b1_p, w2_p, tm, tk)  # [n_pad, c_pad] bf16

    # ---- layer 2 aggregation:  logits = Dinv (A+I) P2 + b2 ---------------------
    logits = _aggregate_final(adj, p2, dinv_col, b2_p, tm, tk)  # [n_pad, c_pad] f32

    return logits[:n, :c]


# ----------------------------------------------------------------------------
# Deterministic parameter init (Glorot-uniform, like GCNConv.reset_parameters)
# ----------------------------------------------------------------------------
def init_params(key, d, hidden, c):
    k1, k2 = jax.random.split(key)

    def glorot(k, fan_in, fan_out):
        lim = jnp.sqrt(6.0 / (fan_in + fan_out))
        return jax.random.uniform(k, (fan_in, fan_out), jnp.float32, -lim, lim)

    return {
        "w1": glorot(k1, d, hidden),
        "b1": jnp.zeros((hidden,), jnp.float32),
        "w2": glorot(k2, hidden, c),
        "b2": jnp.zeros((c,), jnp.float32),
    }


def _reference_forward(x, edge_index, params):
    """Pure-JAX f32 reference (matches PyG GCNConv with gcn_norm)."""
    n = x.shape[0]
    adj = jnp.zeros((n, n), jnp.float32).at[edge_index[1], edge_index[0]].add(1.0)
    diag = jnp.diagonal(adj)
    adj = adj + jnp.diag(jnp.where(diag > 0.0, 0.0, 1.0))
    deg = adj.sum(axis=1)
    dinv = jnp.where(deg > 0.0, jax.lax.rsqrt(deg), 0.0)
    a_hat = adj * dinv[:, None] * dinv[None, :]
    h = jnp.maximum(a_hat @ (x @ params["w1"]) + params["b1"], 0.0)
    return a_hat @ (h @ params["w2"]) + params["b2"]


# TODO(synk): Neco.detect (sklearn StandardScaler/PCA OOD scoring) and
# loss_compute (CE loss) are host-side orchestration around forward(), not kernels.

if __name__ == "__main__":
    key = jax.random.PRNGKey(0)
    kx, ke, kp = jax.random.split(key, 3)

    # Small graph consistent with the module: N nodes, d input feats,
    # hidden_channels=32, c classes, num_layers=2.
    # NOTE: at these toy shapes everything collapses to a single 128-wide tile;
    # the big-tile / bf16 / fused-epilogue levers matter for N in the thousands.
    N, D, HIDDEN, C, E = 16, 8, 32, 4, 40

    x = jax.random.normal(kx, (N, D), jnp.float32)
    edge_index = jax.random.randint(ke, (2, E), 0, N, jnp.int32)
    params = init_params(kp, D, HIDDEN, C)

    fwd = jax.jit(neco_forward)
    logits = fwd(x, edge_index, params)
    jax.block_until_ready(logits)
    assert logits.shape == (N, C)

    # Loose-tolerance correctness check vs. f32 reference (bf16 data path).
    ref = _reference_forward(x, edge_index, params)
    assert jnp.allclose(logits, ref, rtol=7.5e-2, atol=7.5e-2), (
        "mismatch vs reference")

    print("KERNEL_OK")
</pallas_src>

<mosaic_0001>
module attributes {stable_mosaic.version = 11 : i64} {
  func.func @_proj_kernel(%arg0: i32, %arg1: memref<128x128xbf16, #tpu.memory_space<vmem>>, %arg2: memref<128x128xbf16, #tpu.memory_space<vmem>>, %arg3: memref<128x1xf32, #tpu.memory_space<vmem>>, %arg4: memref<128x128xbf16, #tpu.memory_space<vmem>>) attributes {dimension_semantics = [#tpu.dimension_semantics<parallel>], iteration_bounds = array<i64: 1>, scalar_prefetch = 0 : i64, scratch_operands = 0 : i64, tpu.core_type = #tpu.core_type<tc>, window_params = [{transform_indices = @transform_0, window_bounds = array<i64: 128, 128>}, {pipeline_mode = #tpu.pipeline_mode<synchronous>, transform_indices = @transform_1, window_bounds = array<i64: 128, 128>}, {transform_indices = @transform_2, window_bounds = array<i64: 128, 1>}, {transform_indices = @transform_3, window_bounds = array<i64: 128, 128>}]} {
    %c0 = arith.constant 0 : index
    %c0_0 = arith.constant 0 : index
    %0 = vector.load %arg1[%c0, %c0_0] : memref<128x128xbf16, #tpu.memory_space<vmem>>, vector<128x128xbf16>
    %c0_1 = arith.constant 0 : index
    %c0_2 = arith.constant 0 : index
    %1 = vector.load %arg2[%c0_1, %c0_2] : memref<128x128xbf16, #tpu.memory_space<vmem>>, vector<128x128xbf16>
    %cst = arith.constant dense<0.000000e+00> : vector<128x128xf32>
    %2 = tpu.matmul %0, %1, %cst {dimension_numbers = #tpu.dot_dimension_numbers<[1], [0], [0], [1], [0, 0, 1, 1], [], []>} : vector<128x128xbf16>, vector<128x128xbf16>, vector<128x128xf32> -> vector<128x128xf32>
    %c0_3 = arith.constant 0 : index
    %c0_4 = arith.constant 0 : index
    %3 = vector.load %arg3[%c0_3, %c0_4] : memref<128x1xf32, #tpu.memory_space<vmem>>, vector<128x1xf32>
    %4 = vector.broadcast %3 : vector<128x1xf32> to vector<128x128xf32>
    %5 = arith.mulf %4, %2 : vector<128x128xf32>
    %6 = arith.truncf %5 : vector<128x128xf32> to vector<128x128xbf16>
    %c0_5 = arith.constant 0 : index
    %c0_6 = arith.constant 0 : index
    %7 = vector.load %arg4[%c0_5, %c0_6] : memref<128x128xbf16, #tpu.memory_space<vmem>>, vector<128x128xbf16>
    tpu.vector_store %arg4[%c0_5, %c0_6], %6 {strides = array<i32>} : memref<128x128xbf16, #tpu.memory_space<vmem>>, vector<128x128xbf16>,
    return
  }
  func.func @transform_0(%arg0: i32) -> (i32, i32) {
    %c0_i32 = arith.constant 0 : i32
    %c0_i32_0 = arith.constant 0 : i32
    return %arg0, %c0_i32 : i32, i32
  }
  func.func @transform_1(%arg0: i32) -> (i32, i32) {
    %c0_i32 = arith.constant 0 : i32
    %c0_i32_0 = arith.constant 0 : i32
    %c0_i32_1 = arith.constant 0 : i32
    return %c0_i32, %c0_i32_0 : i32, i32
  }
  func.func @transform_2(%arg0: i32) -> (i32, i32) {
    %c0_i32 = arith.constant 0 : i32
    %c0_i32_0 = arith.constant 0 : i32
    return %arg0, %c0_i32 : i32, i32
  }
  func.func @transform_3(%arg0: i32) -> (i32, i32) {
    %c0_i32 = arith.constant 0 : i32
    %c0_i32_0 = arith.constant 0 : i32
    return %arg0, %c0_i32 : i32, i32
  }
}

module attributes {stable_mosaic.version = 11 : i64} {
  func.func @_agg_fused_kernel(%arg0: i32, %arg1: i32, %arg2: memref<128x128xbf16, #tpu.memory_space<vmem>>, %arg3: memref<128x128xbf16, #tpu.memory_space<vmem>>, %arg4: memref<128x1xf32, #tpu.memory_space<vmem>>, %arg5: memref<1x128xf32, #tpu.memory_space<vmem>>, %arg6: memref<128x128xbf16, #tpu.memory_space<vmem>>, %arg7: memref<128x128xbf16, #tpu.memory_space<vmem>>, %arg8: memref<128x128xf32, #tpu.memory_space<vmem>>) attributes {dimension_semantics = [#tpu.dimension_semantics<parallel>, #tpu.dimension_semantics<arbitrary>], iteration_bounds = array<i64: 1, 1>, scalar_prefetch = 0 : i64, scratch_operands = 1 : i64, tpu.core_type = #tpu.core_type<tc>, window_params = [{transform_indices = @transform_0, window_bounds = array<i64: 128, 128>}, {transform_indices = @transform_1, window_bounds = array<i64: 128, 128>}, {transform_indices = @transform_2, window_bounds = array<i64: 128, 1>}, {pipeline_mode = #tpu.pipeline_mode<synchronous>, transform_indices = @transform_3, window_bounds = array<i64: 1, 128>}, {pipeline_mode = #tpu.pipeline_mode<synchronous>, transform_indices = @transform_4, window_bounds = array<i64: 128, 128>}, {transform_indices = @transform_5, window_bounds = array<i64: 128, 128>}]} {
    %c0_i32 = arith.constant 0 : i32
    %0 = arith.cmpi eq, %arg1, %c0_i32 : i32
    %1 = arith.extui %0 : i1 to i32
    %c0_i32_0 = arith.constant 0 : i32
    %2 = arith.cmpi ne, %1, %c0_i32_0 : i32
    scf.if %2 {
      %cst_10 = arith.constant 0.000000e+00 : f32
      %12 = vector.broadcast %cst_10 : f32 to vector<128x128xf32>
      %c0_11 = arith.constant 0 : index
      %c0_12 = arith.constant 0 : index
      %13 = vector.load %arg8[%c0_11, %c0_12] : memref<128x128xf32, #tpu.memory_space<vmem>>, vector<128x128xf32>
      tpu.vector_store %arg8[%c0_11, %c0_12], %12 {strides = array<i32>} : memref<128x128xf32, #tpu.memory_space<vmem>>, vector<128x128xf32>,
    } else {
    }
    %c0 = arith.constant 0 : index
    %c0_1 = arith.constant 0 : index
    %3 = vector.load %arg8[%c0, %c0_1] : memref<128x128xf32, #tpu.memory_space<vmem>>, vector<128x128xf32>
    %c0_2 = arith.constant 0 : index
    %c0_3 = arith.constant 0 : index
    %4 = vector.load %arg2[%c0_2, %c0_3] : memref<128x128xbf16, #tpu.memory_space<vmem>>, vector<128x128xbf16>
    %c0_4 = arith.constant 0 : index
    %c0_5 = arith.constant 0 : index
    %5 = vector.load %arg3[%c0_4, %c0_5] : memref<128x128xbf16, #tpu.memory_space<vmem>>, vector<128x128xbf16>
    %cst = arith.constant dense<0.000000e+00> : vector<128x128xf32>
    %6 = tpu.matmul %4, %5, %cst {dimension_numbers = #tpu.dot_dimension_numbers<[1], [0], [0], [1], [0, 0, 1, 1], [], []>} : vector<128x128xbf16>, vector<128x128xbf16>, vector<128x128xf32> -> vector<128x128xf32>
    %7 = arith.addf %3, %6 : vector<128x128xf32>
    %c0_6 = arith.constant 0 : index
    %c0_7 = arith.constant 0 : index
    %8 = vector.load %arg8[%c0_6, %c0_7] : memref<128x128xf32, #tpu.memory_space<vmem>>, vector<128x128xf32>
    tpu.vector_store %arg8[%c0_6, %c0_7], %7 {strides = array<i32>} : memref<128x128xf32, #tpu.memory_space<vmem>>, vector<128x128xf32>,
    %c0_i32_8 = arith.constant 0 : i32
    %9 = arith.cmpi eq, %arg1, %c0_i32_8 : i32
    %10 = arith.extui %9 : i1 to i32
    %c0_i32_9 = arith.constant 0 : i32
    %11 = arith.cmpi ne, %10, %c0_i32_9 : i32
    scf.if %11 {
      %c0_10 = arith.constant 0 : index
      %c0_11 = arith.constant 0 : index
      %12 = vector.load %arg4[%c0_10, %c0_11] : memref<128x1xf32, #tpu.memory_space<vmem>>, vector<128x1xf32>
      %c0_12 = arith.constant 0 : index
      %c0_13 = arith.constant 0 : index
      %13 = vector.load %arg8[%c0_12, %c0_13] : memref<128x128xf32, #tpu.memory_space<vmem>>, vector<128x128xf32>
      %14 = vector.broadcast %12 : vector<128x1xf32> to vector<128x128xf32>
      %15 = arith.mulf %14, %13 : vector<128x128xf32>
      %c0_14 = arith.constant 0 : index
      %c0_15 = arith.constant 0 : index
      %16 = vector.load %arg5[%c0_14, %c0_15] : memref<1x128xf32, #tpu.memory_space<vmem>>, vector<1x128xf32>
      %17 = vector.broadcast %16 : vector<1x128xf32> to vector<128x128xf32>
      %18 = arith.addf %15, %17 : vector<128x128xf32>
      %cst_16 = arith.constant 0.000000e+00 : f32
      %19 = vector.broadcast %cst_16 : f32 to vector<128x128xf32>
      %20 = arith.maximumf %18, %19 : vector<128x128xf32>
      %21 = arith.truncf %20 : vector<128x128xf32> to vector<128x128xbf16>
      %c0_17 = arith.constant 0 : index
      %c0_18 = arith.constant 0 : index
      %22 = vector.load %arg6[%c0_17, %c0_18] : memref<128x128xbf16, #tpu.memory_space<vmem>>, vector<128x128xbf16>
      %cst_19 = arith.constant dense<0.000000e+00> : vector<128x128xf32>
      %23 = tpu.matmul %21, %22, %cst_19 {dimension_numbers = #tpu.dot_dimension_numbers<[1], [0], [0], [1], [0, 0, 1, 1], [], []>} : vector<128x128xbf16>, vector<128x128xbf16>, vector<128x128xf32> -> vector<128x128xf32>
      %c0_20 = arith.constant 0 : index
      %c0_21 = arith.constant 0 : index
      %24 = vector.load %arg4[%c0_20, %c0_21] : memref<128x1xf32, #tpu.memory_space<vmem>>, vector<128x1xf32>
      %25 = vector.broadcast %24 : vector<128x1xf32> to vector<128x128xf32>
      %26 = arith.mulf %25, %23 : vector<128x128xf32>
      %27 = arith.truncf %26 : vector<128x128xf32> to vector<128x128xbf16>
      %c0_22 = arith.constant 0 : index
      %c0_23 = arith.constant 0 : index
      %28 = vector.load %arg7[%c0_22, %c0_23] : memref<128x128xbf16, #tpu.memory_space<vmem>>, vector<128x128xbf16>
      tpu.vector_store %arg7[%c0_22, %c0_23], %27 {strides = array<i32>} : memref<128x128xbf16, #tpu.memory_space<vmem>>, vector<128x128xbf16>,
    } else {
    }
    return
  }
  func.func @transform_0(%arg0: i32, %arg1: i32) -> (i32, i32) {
    %c0_i32 = arith.constant 0 : i32
    return %arg0, %arg1 : i32, i32
  }
  func.func @transform_1(%arg0: i32, %arg1: i32) -> (i32, i32) {
    %c0_i32 = arith.constant 0 : i32
    %c0_i32_0 = arith.constant 0 : i32
    return %arg1, %c0_i32 : i32, i32
  }
  func.func @transform_2(%arg0: i32, %arg1: i32) -> (i32, i32) {
    %c0_i32 = arith.constant 0 : i32
    %c0_i32_0 = arith.constant 0 : i32
    return %arg0, %c0_i32 : i32, i32
  }
  func.func @transform_3(%arg0: i32, %arg1: i32) -> (i32, i32) {
    %c0_i32 = arith.constant 0 : i32
    %c0_i32_0 = arith.constant 0 : i32
    %c0_i32_1 = arith.constant 0 : i32
    return %c0_i32, %c0_i32_0 : i32, i32
  }
  func.func @transform_4(%arg0: i32, %arg1: i32) -> (i32, i32) {
    %c0_i32 = arith.constant 0 : i32
    %c0_i32_0 = arith.constant 0 : i32
    %c0_i32_1 = arith.constant 0 : i32
    return %c0_i32, %c0_i32_0 : i32, i32
  }
  func.func @transform_5(%arg0: i32, %arg1: i32) -> (i32, i32) {
    %c0_i32 = arith.constant 0 : i32
    %c0_i32_0 = arith.constant 0 : i32
    return %arg0, %c0_i32 : i32, i32
  }
}

module attributes {stable_mosaic.version = 11 : i64} {
  func.func @_agg_final_kernel(%arg0: i32, %arg1: i32, %arg2: memref<128x128xbf16, #tpu.memory_space<vmem>>, %arg3: memref<128x128xbf16, #tpu.memory_space<vmem>>, %arg4: memref<128x1xf32, #tpu.memory_space<vmem>>, %arg5: memref<1x128xf32, #tpu.memory_space<vmem>>, %arg6: memref<128x128xf32, #tpu.memory_space<vmem>>, %arg7: memref<128x128xf32, #tpu.memory_space<vmem>>) attributes {dimension_semantics = [#tpu.dimension_semantics<parallel>, #tpu.dimension_semantics<arbitrary>], iteration_bounds = array<i64: 1, 1>, scalar_prefetch = 0 : i64, scratch_operands = 1 : i64, tpu.core_type = #tpu.core_type<tc>, window_params = [{transform_indices = @transform_0, window_bounds = array<i64: 128, 128>}, {transform_indices = @transform_1, window_bounds = array<i64: 128, 128>}, {transform_indices = @transform_2, window_bounds = array<i64: 128, 1>}, {pipeline_mode = #tpu.pipeline_mode<synchronous>, transform_indices = @transform_3, window_bounds = array<i64: 1, 128>}, {transform_indices = @transform_4, window_bounds = array<i64: 128, 128>}]} {
    %c0_i32 = arith.constant 0 : i32
    %0 = arith.cmpi eq, %arg1, %c0_i32 : i32
    %1 = arith.extui %0 : i1 to i32
    %c0_i32_0 = arith.constant 0 : i32
    %2 = arith.cmpi ne, %1, %c0_i32_0 : i32
    scf.if %2 {
      %cst_10 = arith.constant 0.000000e+00 : f32
      %12 = vector.broadcast %cst_10 : f32 to vector<128x128xf32>
      %c0_11 = arith.constant 0 : index
      %c0_12 = arith.constant 0 : index
      %13 = vector.load %arg7[%c0_11, %c0_12] : memref<128x128xf32, #tpu.memory_space<vmem>>, vector<128x128xf32>
      tpu.vector_store %arg7[%c0_11, %c0_12], %12 {strides = array<i32>} : memref<128x128xf32, #tpu.memory_space<vmem>>, vector<128x128xf32>,
    } else {
    }
    %c0 = arith.constant 0 : index
    %c0_1 = arith.constant 0 : index
    %3 = vector.load %arg7[%c0, %c0_1] : memref<128x128xf32, #tpu.memory_space<vmem>>, vector<128x128xf32>
    %c0_2 = arith.constant 0 : index
    %c0_3 = arith.constant 0 : index
    %4 = vector.load %arg2[%c0_2, %c0_3] : memref<128x128xbf16, #tpu.memory_space<vmem>>, vector<128x128xbf16>
    %c0_4 = arith.constant 0 : index
    %c0_5 = arith.constant 0 : index
    %5 = vector.load %arg3[%c0_4, %c0_5] : memref<128x128xbf16, #tpu.memory_space<vmem>>, vector<128x128xbf16>
    %cst = arith.constant dense<0.000000e+00> : vector<128x128xf32>
    %6 = tpu.matmul %4, %5, %cst {dimension_numbers = #tpu.dot_dimension_numbers<[1], [0], [0], [1], [0, 0, 1, 1], [], []>} : vector<128x128xbf16>, vector<128x128xbf16>, vector<128x128xf32> -> vector<128x128xf32>
    %7 = arith.addf %3, %6 : vector<128x128xf32>
    %c0_6 = arith.constant 0 : index
    %c0_7 = arith.constant 0 : index
    %8 = vector.load %arg7[%c0_6, %c0_7] : memref<128x128xf32, #tpu.memory_space<vmem>>, vector<128x128xf32>
    tpu.vector_store %arg7[%c0_6, %c0_7], %7 {strides = array<i32>} : memref<128x128xf32, #tpu.memory_space<vmem>>, vector<128x128xf32>,
    %c0_i32_8 = arith.constant 0 : i32
    %9 = arith.cmpi eq, %arg1, %c0_i32_8 : i32
    %10 = arith.extui %9 : i1 to i32
    %c0_i32_9 = arith.constant 0 : i32
    %11 = arith.cmpi ne, %10, %c0_i32_9 : i32
    scf.if %11 {
      %c0_10 = arith.constant 0 : index
      %c0_11 = arith.constant 0 : index
      %12 = vector.load %arg4[%c0_10, %c0_11] : memref<128x1xf32, #tpu.memory_space<vmem>>, vector<128x1xf32>
      %c0_12 = arith.constant 0 : index
      %c0_13 = arith.constant 0 : index
      %13 = vector.load %arg7[%c0_12, %c0_13] : memref<128x128xf32, #tpu.memory_space<vmem>>, vector<128x128xf32>
      %14 = vector.broadcast %12 : vector<128x1xf32> to vector<128x128xf32>
      %15 = arith.mulf %14, %13 : vector<128x128xf32>
      %c0_14 = arith.constant 0 : index
      %c0_15 = arith.constant 0 : index
      %16 = vector.load %arg5[%c0_14, %c0_15] : memref<1x128xf32, #tpu.memory_space<vmem>>, vector<1x128xf32>
      %17 = vector.broadcast %16 : vector<1x128xf32> to vector<128x128xf32>
      %18 = arith.addf %15, %17 : vector<128x128xf32>
      %c0_16 = arith.constant 0 : index
      %c0_17 = arith.constant 0 : index
      %19 = vector.load %arg6[%c0_16, %c0_17] : memref<128x128xf32, #tpu.memory_space<vmem>>, vector<128x128xf32>
      tpu.vector_store %arg6[%c0_16, %c0_17], %18 {strides = array<i32>} : memref<128x128xf32, #tpu.memory_space<vmem>>, vector<128x128xf32>,
    } else {
    }
    return
  }
  func.func @transform_0(%arg0: i32, %arg1: i32) -> (i32, i32) {
    %c0_i32 = arith.constant 0 : i32
    return %arg0, %arg1 : i32, i32
  }
  func.func @transform_1(%arg0: i32, %arg1: i32) -> (i32, i32) {
    %c0_i32 = arith.constant 0 : i32
    %c0_i32_0 = arith.constant 0 : i32
    return %arg1, %c0_i32 : i32, i32
  }
  func.func @transform_2(%arg0: i32, %arg1: i32) -> (i32, i32) {
    %c0_i32 = arith.constant 0 : i32
    %c0_i32_0 = arith.constant 0 : i32
    return %arg0, %c0_i32 : i32, i32
  }
  func.func @transform_3(%arg0: i32, %arg1: i32) -> (i32, i32) {
    %c0_i32 = arith.constant 0 : i32
    %c0_i32_0 = arith.constant 0 : i32
    %c0_i32_1 = arith.constant 0 : i32
    return %c0_i32, %c0_i32_0 : i32, i32
  }
  func.func @transform_4(%arg0: i32, %arg1: i32) -> (i32, i32) {
    %c0_i32 = arith.constant 0 : i32
    %c0_i32_0 = arith.constant 0 : i32
    return %arg0, %c0_i32 : i32, i32
  }
}

</mosaic_0001>

<llo_original>
// kernel: neco_forward.3
$region0: #{neco_forward.3}
  #allocation0 [shape = 'u32[]', space=smem, size = 0x4, offset = 0x4, fixed_abs, tag = 'smem constant byte address 0x4 - core index']
  #allocation1 [shape = 'u32[72,128]{1,0:T(1,128)}', space=vmem, size = 0x9000, scoped, tag = 'internal scratch']
  %s0 = inlined_call_operand.vmem [shape: bf16[128,128], index: 0, kind: input, shape index: {}]
  %s1 = inlined_call_operand.vmem [shape: bf16[128,128], index: 1, kind: input, shape index: {}]
  %s2 = inlined_call_operand.vmem [shape: f32[128,1], index: 2, kind: input, shape index: {}]
  %s3 = inlined_call_operand.vmem [shape: bf16[128,128], index: 3, kind: output, shape index: {}]
  %s4 = sld [smem:[#allocation0]]
  $region22: #{neco_forward.3} parent=0
    _
  %s6 = ssub.s32 1, %s4
  %s7 = scalar_select 0, %s6, %s4
  // Predicated region
  $region2: #{neco_forward.3} parent=0 // pred_check
    _
  $region3: #{neco_forward.3} parent=0 // pred_check_branch
    %9 = sbr.rel (0) target = $region5
  $region4: #{neco_forward.3} parent=0 // pred_region
    _
  $region5: #{neco_forward.3} parent=0 // pred_fallthru
    _
  // Predicated region
  $region6: #{neco_forward.3} parent=0 // pred_check
    _
  $region7: #{neco_forward.3} parent=0 // pred_check_branch
    %11 = sbr.rel (0) target = $region9
  $region8: #{neco_forward.3} parent=0 // pred_region
    _
  $region9: #{neco_forward.3} parent=0 // pred_fallthru
    _
  // Predicated region
  $region10: #{neco_forward.3} parent=0 // pred_check
    _
  $region11: #{neco_forward.3} parent=0 // pred_check_branch
    %13 = sbr.rel (0) target = $region13
  $region12: #{neco_forward.3} parent=0 // pred_region
    _
  $region13: #{neco_forward.3} parent=0 // pred_fallthru
    _
  %v14 = vld [vmem:[%s0] sm:$0xf]
  %v15 = vld [vmem:[%s0 + $0x4] sm:$0xf]
  %v16 = vld [vmem:[%s0 + $0x8] sm:$0xf]
  %v17 = vld [vmem:[%s0 + $0xc] sm:$0xf]
  %v18 = vld [vmem:[%s0 + $0x10] sm:$0xf]
  %v19 = vld [vmem:[%s0 + $0x14] sm:$0xf]
  %v20 = vld [vmem:[%s0 + $0x18] sm:$0xf]
  %v21 = vld [vmem:[%s0 + $0x1c] sm:$0xf]
  %v22 = vld [vmem:[%s0 + $0x20] sm:$0xf]
  %v23 = vld [vmem:[%s0 + $0x24] sm:$0xf]
  %v24 = vld [vmem:[%s0 + $0x28] sm:$0xf]
  %v25 = vld [vmem:[%s0 + $0x2c] sm:$0xf]
  %v26 = vld [vmem:[%s0 + $0x30] sm:$0xf]
  %v27 = vld [vmem:[%s0 + $0x34] sm:$0xf]
  %v28 = vld [vmem:[%s0 + $0x38] sm:$0xf]
  %v29 = vld [vmem:[%s0 + $0x3c] sm:$0xf]
  %v30 = vld [vmem:[%s1] sm:$0xf]
  %v31 = vld [vmem:[%s1 + $0x4] sm:$0xf]
  %v32 = vld [vmem:[%s1 + $0x8] sm:$0xf]
  %v33 = vld [vmem:[%s1 + $0xc] sm:$0xf]
  %v34 = vld [vmem:[%s1 + $0x10] sm:$0xf]
  %v35 = vld [vmem:[%s1 + $0x14] sm:$0xf]
  %v36 = vld [vmem:[%s1 + $0x18] sm:$0xf]
  %v37 = vld [vmem:[%s1 + $0x1c] sm:$0xf]
  %v38 = vld [vmem:[%s1 + $0x20] sm:$0xf]
  %v39 = vld [vmem:[%s1 + $0x24] sm:$0xf]
  %v40 = vld [vmem:[%s1 + $0x28] sm:$0xf]
  %v41 = vld [vmem:[%s1 + $0x2c] sm:$0xf]
  %v42 = vld [vmem:[%s1 + $0x30] sm:$0xf]
  %v43 = vld [vmem:[%s1 + $0x34] sm:$0xf]
  %v44 = vld [vmem:[%s1 + $0x38] sm:$0xf]
  %v45 = vld [vmem:[%s1 + $0x3c] sm:$0xf]
  %v62 = vunpack.c.l.b16 %v14
  %v63 = vunpack.c.l.b16 %v15
  %v64 = vunpack.c.l.b16 %v16
  %v65 = vunpack.c.l.b16 %v17
  %v66 = vunpack.c.l.b16 %v18
  %v67 = vunpack.c.l.b16 %v19
  %v68 = vunpack.c.l.b16 %v20
  %v69 = vunpack.c.l.b16 %v21
  %v70 = vunpack.c.l.b16 %v22
  %v71 = vunpack.c.l.b16 %v23
  %v72 = vunpack.c.l.b16 %v24
  %v73 = vunpack.c.l.b16 %v25
  %v74 = vunpack.c.l.b16 %v26
  %v75 = vunpack.c.l.b16 %v27
  %v76 = vunpack.c.l.b16 %v28
  %v77 = vunpack.c.l.b16 %v29
  %v78 = vpack.c.b16 %v63, %v62
  %v79 = vpack.c.b16 %v65, %v64
  %v80 = vpack.c.b16 %v67, %v66
  %v81 = vpack.c.b16 %v69, %v68
  %v82 = vpack.c.b16 %v71, %v70
  %v83 = vpack.c.b16 %v73, %v72
  %v84 = vpack.c.b16 %v75, %v74
  %v85 = vpack.c.b16 %v77, %v76
  %v110 = vunpack.c.l.b16 %v30
  %v111 = vunpack.c.l.b16 %v31
  %v112 = vunpack.c.l.b16 %v32
  %v113 = vunpack.c.l.b16 %v33
  %v114 = vunpack.c.l.b16 %v34
  %v115 = vunpack.c.l.b16 %v35
  %v116 = vunpack.c.l.b16 %v36
  %v117 = vunpack.c.l.b16 %v37
  %v118 = vunpack.c.l.b16 %v38
  %v119 = vunpack.c.l.b16 %v39
  %v120 = vunpack.c.l.b16 %v40
  %v121 = vunpack.c.l.b16 %v41
  %v122 = vunpack.c.l.b16 %v42
  %v123 = vunpack.c.l.b16 %v43
  %v124 = vunpack.c.l.b16 %v44
  %v125 = vunpack.c.l.b16 %v45
  %v126 = vpack.c.b16 %v111, %v110
  %v127 = vpack.c.b16 %v113, %v112
  %v128 = vpack.c.b16 %v115, %v114
  %v129 = vpack.c.b16 %v117, %v116
  %v130 = vpack.c.b16 %v119, %v118
  %v131 = vpack.c.b16 %v121, %v120
  %v132 = vpack.c.b16 %v123, %v122
  %v133 = vpack.c.b16 %v125, %v124
  %142 = vmatpush.bf16.msra.mxu0 %v133
  %143 = vmatpush.bf16.msra.mxu0 %v132
  %144 = vmatpush.bf16.msra.mxu0 %v131
  %145 = vmatpush.bf16.msra.mxu0 %v130
  %146 = vmatpush.bf16.msra.mxu0 %v129
  %147 = vmatpush.bf16.msra.mxu0 %v128
  %148 = vmatpush.bf16.msra.mxu0 %v127
  %149 = vmatpush.bf16.msra.mxu0 %v126
  %150 = vmatmul.bf16.gmra.mxu0 %v78
  %v151 = vpop.f32.mrf.mxu0
  %v152 = vadd.f32 0.0, %v151
  %v153 = vpop.f32.mrf.mxu0
  %v154 = vadd.f32 0.0, %v153
  %155 = vmatmul.bf16.gmra.mxu0 %v79
  %v156 = vpop.f32.mrf.mxu0
  %v157 = vadd.f32 0.0, %v156
  %v158 = vpop.f32.mrf.mxu0
  %v159 = vadd.f32 0.0, %v158
  %160 = vmatmul.bf16.gmra.mxu0 %v80
  %v161 = vpop.f32.mrf.mxu0
  %v162 = vadd.f32 0.0, %v161
  %v163 = vpop.f32.mrf.mxu0
  %v164 = vadd.f32 0.0, %v163
  %165 = vmatmul.bf16.gmra.mxu0 %v81
  %v166 = vpop.f32.mrf.mxu0
  %v167 = vadd.f32 0.0, %v166
  %v168 = vpop.f32.mrf.mxu0
  %v169 = vadd.f32 0.0, %v168
  %170 = vmatmul.bf16.gmra.mxu0 %v82
  %v171 = vpop.f32.mrf.mxu0
  %v172 = vadd.f32 0.0, %v171
  %v173 = vpop.f32.mrf.mxu0
  %v174 = vadd.f32 0.0, %v173
  %175 = vmatmul.bf16.gmra.mxu0 %v83
  %v176 = vpop.f32.mrf.mxu0
  %v177 = vadd.f32 0.0, %v176
  %v178 = vpop.f32.mrf.mxu0
  %v179 = vadd.f32 0.0, %v178
  %180 = vmatmul.bf16.gmra.mxu0 %v84
  %v181 = vpop.f32.mrf.mxu0
  %v182 = vadd.f32 0.0, %v181
  %v183 = vpop.f32.mrf.mxu0
  %v184 = vadd.f32 0.0, %v183
  %185 = vmatmul.bf16.gmra.mxu0 %v85
  %v186 = vpop.f32.mrf.mxu0
  %v187 = vadd.f32 0.0, %v186
  %v188 = vpop.f32.mrf.mxu0
  %v189 = vadd.f32 0.0, %v188
  %190 = vdwg.mxu0
  %v191 = vld [vmem:[%s2] sm:$0xff]
  %v192 = vld [vmem:[%s2 + $0x8] sm:$0xff]
  %v193 = vld [vmem:[%s2 + $0x10] sm:$0xff]
  %v194 = vld [vmem:[%s2 + $0x18] sm:$0xff]
  %v195 = vld [vmem:[%s2 + $0x20] sm:$0xff]
  %v196 = vld [vmem:[%s2 + $0x28] sm:$0xff]
  %v197 = vld [vmem:[%s2 + $0x30] sm:$0xff]
  %v198 = vld [vmem:[%s2 + $0x38] sm:$0xff]
  %v199 = vld [vmem:[%s2 + $0x40] sm:$0xff]
  %v200 = vld [vmem:[%s2 + $0x48] sm:$0xff]
  %v201 = vld [vmem:[%s2 + $0x50] sm:$0xff]
  %v202 = vld [vmem:[%s2 + $0x58] sm:$0xff]
  %v203 = vld [vmem:[%s2 + $0x60] sm:$0xff]
  %v204 = vld [vmem:[%s2 + $0x68] sm:$0xff]
  %v205 = vld [vmem:[%s2 + $0x70] sm:$0xff]
  %v206 = vld [vmem:[%s2 + $0x78] sm:$0xff]
  %208 = vset.pattern.permute.xlu0 0
  %209 = vperm.xlu0 %208, %v191
  %v210 = vpop.permute.xlu0 %209
  %213 = vset.pattern.permute.xlu0 0
  %214 = vperm.xlu0 %213, %v192
  %v215 = vpop.permute.xlu0 %214
  %218 = vset.pattern.permute.xlu0 0
  %219 = vperm.xlu0 %218, %v193
  %v220 = vpop.permute.xlu0 %219
  %223 = vset.pattern.permute.xlu0 0
  %224 = vperm.xlu0 %223, %v194
  %v225 = vpop.permute.xlu0 %224
  %228 = vset.pattern.permute.xlu0 0
  %229 = vperm.xlu0 %228, %v195
  %v230 = vpop.permute.xlu0 %229
  %233 = vset.pattern.permute.xlu0 0
  %234 = vperm.xlu0 %233, %v196
  %v235 = vpop.permute.xlu0 %234
  %238 = vset.pattern.permute.xlu0 0
  %239 = vperm.xlu0 %238, %v197
  %v240 = vpop.permute.xlu0 %239
  %243 = vset.pattern.permute.xlu0 0
  %244 = vperm.xlu0 %243, %v198
  %v245 = vpop.permute.xlu0 %244
  %248 = vset.pattern.permute.xlu0 0
  %249 = vperm.xlu0 %248, %v199
  %v250 = vpop.permute.xlu0 %249
  %253 = vset.pattern.permute.xlu0 0
  %254 = vperm.xlu0 %253, %v200
  %v255 = vpop.permute.xlu0 %254
  %258 = vset.pattern.permute.xlu0 0
  %259 = vperm.xlu0 %258, %v201
  %v260 = vpop.permute.xlu0 %259
  %263 = vset.pattern.permute.xlu0 0
  %264 = vperm.xlu0 %263, %v202
  %v265 = vpop.permute.xlu0 %264
  %268 = vset.pattern.permute.xlu0 0
  %269 = vperm.xlu0 %268, %v203
  %v270 = vpop.permute.xlu0 %269
  %273 = vset.pattern.permute.xlu0 0
  %274 = vperm.xlu0 %273, %v204
  %v275 = vpop.permute.xlu0 %274
  %278 = vset.pattern.permute.xlu0 0
  %279 = vperm.xlu0 %278, %v205
  %v280 = vpop.permute.xlu0 %279
  %283 = vset.pattern.permute.xlu0 0
  %284 = vperm.xlu0 %283, %v206
  %v285 = vpop.permute.xlu0 %284
  %v287 = vmul.f32 %v210, %v152
  %v288 = vmul.f32 %v215, %v154
  %v289 = vmul.f32 %v220, %v157
  %v290 = vmul.f32 %v225, %v159
  %v291 = vmul.f32 %v230, %v162
  %v292 = vmul.f32 %v235, %v164
  %v293 = vmul.f32 %v240, %v167
  %v294 = vmul.f32 %v245, %v169
  %v295 = vmul.f32 %v250, %v172
  %v296 = vmul.f32 %v255, %v174
  %v297 = vmul.f32 %v260, %v177
  %v298 = vmul.f32 %v265, %v179
  %v299 = vmul.f32 %v270, %v182
  %v300 = vmul.f32 %v275, %v184
  %v301 = vmul.f32 %v280, %v187
  %v302 = vmul.f32 %v285, %v189
  %v303 = vpack.c.bf16 %v287, %v287
  %v304 = vpack.c.bf16 %v288, %v288
  %v305 = vpack.c.bf16 %v289, %v289
  %v306 = vpack.c.bf16 %v290, %v290
  %v307 = vpack.c.bf16 %v291, %v291
  %v308 = vpack.c.bf16 %v292, %v292
  %v309 = vpack.c.bf16 %v293, %v293
  %v310 = vpack.c.bf16 %v294, %v294
  %v311 = vpack.c.bf16 %v295, %v295
  %v312 = vpack.c.bf16 %v296, %v296
  %v313 = vpack.c.bf16 %v297, %v297
  %v314 = vpack.c.bf16 %v298, %v298
  %v315 = vpack.c.bf16 %v299, %v299
  %v316 = vpack.c.bf16 %v300, %v300
  %v317 = vpack.c.bf16 %v301, %v301
  %v318 = vpack.c.bf16 %v302, %v302
  %319 = vst [vmem:[%s3] sm:$0xf] %v303
  %320 = vst [vmem:[%s3 + $0x4] sm:$0xf] %v304
  %321 = vst [vmem:[%s3 + $0x8] sm:$0xf] %v305
  %322 = vst [vmem:[%s3 + $0xc] sm:$0xf] %v306
  %323 = vst [vmem:[%s3 + $0x10] sm:$0xf] %v307
  %324 = vst [vmem:[%s3 + $0x14] sm:$0xf] %v308
  %325 = vst [vmem:[%s3 + $0x18] sm:$0xf] %v309
  %326 = vst [vmem:[%s3 + $0x1c] sm:$0xf] %v310
  %327 = vst [vmem:[%s3 + $0x20] sm:$0xf] %v311
  %328 = vst [vmem:[%s3 + $0x24] sm:$0xf] %v312
  %329 = vst [vmem:[%s3 + $0x28] sm:$0xf] %v313
  %330 = vst [vmem:[%s3 + $0x2c] sm:$0xf] %v314
  %331 = vst [vmem:[%s3 + $0x30] sm:$0xf] %v315
  %332 = vst [vmem:[%s3 + $0x34] sm:$0xf] %v316
  %333 = vst [vmem:[%s3 + $0x38] sm:$0xf] %v317
  %334 = vst [vmem:[%s3 + $0x3c] sm:$0xf] %v318
  // Predicated region
  $region14: #{neco_forward.3} parent=0 // pred_check
    _
  $region15: #{neco_forward.3} parent=0 // pred_check_branch
    %336 = sbr.rel (0) target = $region17
  $region16: #{neco_forward.3} parent=0 // pred_region
    _
  $region17: #{neco_forward.3} parent=0 // pred_fallthru
    _
  // Predicated region
  $region18: #{neco_forward.3} parent=0 // pred_check
    _
  $region19: #{neco_forward.3} parent=0 // pred_check_branch
    %338 = sbr.rel (0) target = $region21
  $region20: #{neco_forward.3} parent=0 // pred_region
    _
  $region21: #{neco_forward.3} parent=0 // pred_fallthru
    _

// kernel: neco_forward.4
$region0: #{neco_forward.4}
  #allocation0 [shape = 'u32[]', space=smem, size = 0x4, offset = 0x4, fixed_abs, tag = 'smem constant byte address 0x4 - core index']
  #allocation1 [shape = 'u32[72,128]{1,0:T(1,128)}', space=vmem, size = 0x9000, scoped, tag = 'internal scratch']
  #allocation2 [shape = 'f32[128,128]{1,0:T(8,128)}', space=vmem, size = 0x10000, scoped, tag = 'scratch operand']
  %s0 = inlined_call_operand.vmem [shape: bf16[128,128], index: 0, kind: input, shape index: {}]
  %s1 = inlined_call_operand.vmem [shape: bf16[128,128], index: 1, kind: input, shape index: {}]
  %s2 = inlined_call_operand.vmem [shape: f32[128,1], index: 2, kind: input, shape index: {}]
  %s3 = inlined_call_operand.vmem [shape: f32[1,128], index: 3, kind: input, shape index: {}]
  %s4 = inlined_call_operand.vmem [shape: bf16[128,128], index: 4, kind: input, shape index: {}]
  %s5 = inlined_call_operand.vmem [shape: bf16[128,128], index: 5, kind: output, shape index: {}]
  %s6 = sld [smem:[#allocation0]]
  $region38: #{neco_forward.4} parent=0
    _
  %s8 = ssub.s32 1, %s6
  %s9 = scalar_select 0, %s8, %s6
  // Predicated region
  $region2: #{neco_forward.4} parent=0 // pred_check
    _
  $region3: #{neco_forward.4} parent=0 // pred_check_branch
    %11 = sbr.rel (0) target = $region5
  $region4: #{neco_forward.4} parent=0 // pred_region
    _
  $region5: #{neco_forward.4} parent=0 // pred_fallthru
    _
  // Predicated region
  $region6: #{neco_forward.4} parent=0 // pred_check
    _
  $region7: #{neco_forward.4} parent=0 // pred_check_branch
    %13 = sbr.rel (0) target = $region9
  $region8: #{neco_forward.4} parent=0 // pred_region
    _
  $region9: #{neco_forward.4} parent=0 // pred_fallthru
    _
  // Predicated region
  $region10: #{neco_forward.4} parent=0 // pred_check
    _
  $region11: #{neco_forward.4} parent=0 // pred_check_branch
    %15 = sbr.rel (0) target = $region13
  $region12: #{neco_forward.4} parent=0 // pred_region
    _
  $region13: #{neco_forward.4} parent=0 // pred_fallthru
    _
  // Predicated region
  $region14: #{neco_forward.4} parent=0 // pred_check
    _
  $region15: #{neco_forward.4} parent=0 // pred_check_branch
    %17 = sbr.rel (0) target = $region17
  $region16: #{neco_forward.4} parent=0 // pred_region
    _
  $region17: #{neco_forward.4} parent=0 // pred_fallthru
    _
  // Predicated region
  $region18: #{neco_forward.4} parent=0 // pred_check
    _
  $region19: #{neco_forward.4} parent=0 // pred_check_branch
    %19 = sbr.rel (0) target = $region21
  $region20: #{neco_forward.4} parent=0 // pred_region
    _
  $region21: #{neco_forward.4} parent=0 // pred_fallthru
    _
  %p20 = scmp.eq.s32.totalorder 0, 0
  // Predicated region
  $region22: #{neco_forward.4} parent=0 // pred_check
    %p21 = pneg %p20
  $region23: #{neco_forward.4} parent=0 // pred_check_branch
    %23 = sbr.rel (%p21) target = $region25
  $region24: #{neco_forward.4} parent=0 // pred_region
    %24 = vst [vmem:[#allocation2] sm:$0xff] 0.0
    %25 = vst [vmem:[#allocation2 + $0x8] sm:$0xff] 0.0
    %26 = vst [vmem:[#allocation2 + $0x10] sm:$0xff] 0.0
    %27 = vst [vmem:[#allocation2 + $0x18] sm:$0xff] 0.0
    %28 = vst [vmem:[#allocation2 + $0x20] sm:$0xff] 0.0
    %29 = vst [vmem:[#allocation2 + $0x28] sm:$0xff] 0.0
    %30 = vst [vmem:[#allocation2 + $0x30] sm:$0xff] 0.0
    %31 = vst [vmem:[#allocation2 + $0x38] sm:$0xff] 0.0
    %32 = vst [vmem:[#allocation2 + $0x40] sm:$0xff] 0.0
    %33 = vst [vmem:[#allocation2 + $0x48] sm:$0xff] 0.0
    %34 = vst [vmem:[#allocation2 + $0x50] sm:$0xff] 0.0
    %35 = vst [vmem:[#allocation2 + $0x58] sm:$0xff] 0.0
    %36 = vst [vmem:[#allocation2 + $0x60] sm:$0xff] 0.0
    %37 = vst [vmem:[#allocation2 + $0x68] sm:$0xff] 0.0
    %38 = vst [vmem:[#allocation2 + $0x70] sm:$0xff] 0.0
    %39 = vst [vmem:[#allocation2 + $0x78] sm:$0xff] 0.0
  $region25: #{neco_forward.4} parent=0 // pred_fallthru
    _
  %v40 = vld [vmem:[#allocation2] sm:$0xff]
  %v41 = vld [vmem:[#allocation2 + $0x8] sm:$0xff]
  %v42 = vld [vmem:[#allocation2 + $0x10] sm:$0xff]
  %v43 = vld [vmem:[#allocation2 + $0x18] sm:$0xff]
  %v44 = vld [vmem:[#allocation2 + $0x20] sm:$0xff]
  %v45 = vld [vmem:[#allocation2 + $0x28] sm:$0xff]
  %v46 = vld [vmem:[#allocation2 + $0x30] sm:$0xff]
  %v47 = vld [vmem:[#allocation2 + $0x38] sm:$0xff]
  %v48 = vld [vmem:[#allocation2 + $0x40] sm:$0xff]
  %v49 = vld [vmem:[#allocation2 + $0x48] sm:$0xff]
  %v50 = vld [vmem:[#allocation2 + $0x50] sm:$0xff]
  %v51 = vld [vmem:[#allocation2 + $0x58] sm:$0xff]
  %v52 = vld [vmem:[#allocation2 + $0x60] sm:$0xff]
  %v53 = vld [vmem:[#allocation2 + $0x68] sm:$0xff]
  %v54 = vld [vmem:[#allocation2 + $0x70] sm:$0xff]
  %v55 = vld [vmem:[#allocation2 + $0x78] sm:$0xff]
  %v56 = vld [vmem:[%s0] sm:$0xf]
  %v57 = vld [vmem:[%s0 + $0x4] sm:$0xf]
  %v58 = vld [vmem:[%s0 + $0x8] sm:$0xf]
  %v59 = vld [vmem:[%s0 + $0xc] sm:$0xf]
  %v60 = vld [vmem:[%s0 + $0x10] sm:$0xf]
  %v61 = vld [vmem:[%s0 + $0x14] sm:$0xf]
  %v62 = vld [vmem:[%s0 + $0x18] sm:$0xf]
  %v63 = vld [vmem:[%s0 + $0x1c] sm:$0xf]
  %v64 = vld [vmem:[%s0 + $0x20] sm:$0xf]
  %v65 = vld [vmem:[%s0 + $0x24] sm:$0xf]
  %v66 = vld [vmem:[%s0 + $0x28] sm:$0xf]
  %v67 = vld [vmem:[%s0 + $0x2c] sm:$0xf]
  %v68 = vld [vmem:[%s0 + $0x30] sm:$0xf]
  %v69 = vld [vmem:[%s0 + $0x34] sm:$0xf]
  %v70 = vld [vmem:[%s0 + $0x38] sm:$0xf]
  %v71 = vld [vmem:[%s0 + $0x3c] sm:$0xf]
  %v72 = vld [vmem:[%s1] sm:$0xf]
  %v73 = vld [vmem:[%s1 + $0x4] sm:$0xf]
  %v74 = vld [vmem:[%s1 + $0x8] sm:$0xf]
  %v75 = vld [vmem:[%s1 + $0xc] sm:$0xf]
  %v76 = vld [vmem:[%s1 + $0x10] sm:$0xf]
  %v77 = vld [vmem:[%s1 + $0x14] sm:$0xf]
  %v78 = vld [vmem:[%s1 + $0x18] sm:$0xf]
  %v79 = vld [vmem:[%s1 + $0x1c] sm:$0xf]
  %v80 = vld [vmem:[%s1 + $0x20] sm:$0xf]
  %v81 = vld [vmem:[%s1 + $0x24] sm:$0xf]
  %v82 = vld [vmem:[%s1 + $0x28] sm:$0xf]
  %v83 = vld [vmem:[%s1 + $0x2c] sm:$0xf]
  %v84 = vld [vmem:[%s1 + $0x30] sm:$0xf]
  %v85 = vld [vmem:[%s1 + $0x34] sm:$0xf]
  %v86 = vld [vmem:[%s1 + $0x38] sm:$0xf]
  %v87 = vld [vmem:[%s1 + $0x3c] sm:$0xf]
  %v104 = vunpack.c.l.b16 %v56
  %v105 = vunpack.c.l.b16 %v57
  %v106 = vunpack.c.l.b16 %v58
  %v107 = vunpack.c.l.b16 %v59
  %v108 = vunpack.c.l.b16 %v60
  %v109 = vunpack.c.l.b16 %v61
  %v110 = vunpack.c.l.b16 %v62
  %v111 = vunpack.c.l.b16 %v63
  %v112 = vunpack.c.l.b16 %v64
  %v113 = vunpack.c.l.b16 %v65
  %v114 = vunpack.c.l.b16 %v66
  %v115 = vunpack.c.l.b16 %v67
  %v116 = vunpack.c.l.b16 %v68
  %v117 = vunpack.c.l.b16 %v69
  %v118 = vunpack.c.l.b16 %v70
  %v119 = vunpack.c.l.b16 %v71
  %v120 = vpack.c.b16 %v105, %v104
  %v121 = vpack.c.b16 %v107, %v106
  %v122 = vpack.c.b16 %v109, %v108
  %v123 = vpack.c.b16 %v111, %v110
  %v124 = vpack.c.b16 %v113, %v112
  %v125 = vpack.c.b16 %v115, %v114
  %v126 = vpack.c.b16 %v117, %v116
  %v127 = vpack.c.b16 %v119, %v118
  %v152 = vunpack.c.l.b16 %v72
  %v153 = vunpack.c.l.b16 %v73
  %v154 = vunpack.c.l.b16 %v74
  %v155 = vunpack.c.l.b16 %v75
  %v156 = vunpack.c.l.b16 %v76
  %v157 = vunpack.c.l.b16 %v77
  %v158 = vunpack.c.l.b16 %v78
  %v159 = vunpack.c.l.b16 %v79
  %v160 = vunpack.c.l.b16 %v80
  %v161 = vunpack.c.l.b16 %v81
  %v162 = vunpack.c.l.b16 %v82
  %v163 = vunpack.c.l.b16 %v83
  %v164 = vunpack.c.l.b16 %v84
  %v165 = vunpack.c.l.b16 %v85
  %v166 = vunpack.c.l.b16 %v86
  %v167 = vunpack.c.l.b16 %v87
  %v168 = vpack.c.b16 %v153, %v152
  %v169 = vpack.c.b16 %v155, %v154
  %v170 = vpack.c.b16 %v157, %v156
  %v171 = vpack.c.b16 %v159, %v158
  %v172 = vpack.c.b16 %v161, %v160
  %v173 = vpack.c.b16 %v163, %v162
  %v174 = vpack.c.b16 %v165, %v164
  %v175 = vpack.c.b16 %v167, %v166
  %184 = vmatpush.bf16.msra.mxu0 %v175
  %185 = vmatpush.bf16.msra.mxu0 %v174
  %186 = vmatpush.bf16.msra.mxu0 %v173
  %187 = vmatpush.bf16.msra.mxu0 %v172
  %188 = vmatpush.bf16.msra.mxu0 %v171
  %189 = vmatpush.bf16.msra.mxu0 %v170
  %190 = vmatpush.bf16.msra.mxu0 %v169
  %191 = vmatpush.bf16.msra.mxu0 %v168
  %192 = vmatmul.bf16.gmra.mxu0 %v120
  %v193 = vpop.f32.mrf.mxu0
  %v194 = vadd.f32 0.0, %v193
  %v195 = vpop.f32.mrf.mxu0
  %v196 = vadd.f32 0.0, %v195
  %197 = vmatmul.bf16.gmra.mxu0 %v121
  %v198 = vpop.f32.mrf.mxu0
  %v199 = vadd.f32 0.0, %v198
  %v200 = vpop.f32.mrf.mxu0
  %v201 = vadd.f32 0.0, %v200
  %202 = vmatmul.bf16.gmra.mxu0 %v122
  %v203 = vpop.f32.mrf.mxu0
  %v204 = vadd.f32 0.0, %v203
  %v205 = vpop.f32.mrf.mxu0
  %v206 = vadd.f32 0.0, %v205
  %207 = vmatmul.bf16.gmra.mxu0 %v123
  %v208 = vpop.f32.mrf.mxu0
  %v209 = vadd.f32 0.0, %v208
  %v210 = vpop.f32.mrf.mxu0
  %v211 = vadd.f32 0.0, %v210
  %212 = vmatmul.bf16.gmra.mxu0 %v124
  %v213 = vpop.f32.mrf.mxu0
  %v214 = vadd.f32 0.0, %v213
  %v215 = vpop.f32.mrf.mxu0
  %v216 = vadd.f32 0.0, %v215
  %217 = vmatmul.bf16.gmra.mxu0 %v125
  %v218 = vpop.f32.mrf.mxu0
  %v219 = vadd.f32 0.0, %v218
  %v220 = vpop.f32.mrf.mxu0
  %v221 = vadd.f32 0.0, %v220
  %222 = vmatmul.bf16.gmra.mxu0 %v126
  %v223 = vpop.f32.mrf.mxu0
  %v224 = vadd.f32 0.0, %v223
  %v225 = vpop.f32.mrf.mxu0
  %v226 = vadd.f32 0.0, %v225
  %227 = vmatmul.bf16.gmra.mxu0 %v127
  %v228 = vpop.f32.mrf.mxu0
  %v229 = vadd.f32 0.0, %v228
  %v230 = vpop.f32.mrf.mxu0
  %v231 = vadd.f32 0.0, %v230
  %232 = vdwg.mxu0
  %v233 = vadd.f32 %v40, %v194
  %v234 = vadd.f32 %v41, %v196
  %v235 = vadd.f32 %v42, %v199
  %v236 = vadd.f32 %v43, %v201
  %v237 = vadd.f32 %v44, %v204
  %v238 = vadd.f32 %v45, %v206
  %v239 = vadd.f32 %v46, %v209
  %v240 = vadd.f32 %v47, %v211
  %v241 = vadd.f32 %v48, %v214
  %v242 = vadd.f32 %v49, %v216
  %v243 = vadd.f32 %v50, %v219
  %v244 = vadd.f32 %v51, %v221
  %v245 = vadd.f32 %v52, %v224
  %v246 = vadd.f32 %v53, %v226
  %v247 = vadd.f32 %v54, %v229
  %v248 = vadd.f32 %v55, %v231
  %249 = vst [vmem:[#allocation2] sm:$0xff] %v233
  %250 = vst [vmem:[#allocation2 + $0x8] sm:$0xff] %v234
  %251 = vst [vmem:[#allocation2 + $0x10] sm:$0xff] %v235
  %252 = vst [vmem:[#allocation2 + $0x18] sm:$0xff] %v236
  %253 = vst [vmem:[#allocation2 + $0x20] sm:$0xff] %v237
  %254 = vst [vmem:[#allocation2 + $0x28] sm:$0xff] %v238
  %255 = vst [vmem:[#allocation2 + $0x30] sm:$0xff] %v239
  %256 = vst [vmem:[#allocation2 + $0x38] sm:$0xff] %v240
  %257 = vst [vmem:[#allocation2 + $0x40] sm:$0xff] %v241
  %258 = vst [vmem:[#allocation2 + $0x48] sm:$0xff] %v242
  %259 = vst [vmem:[#allocation2 + $0x50] sm:$0xff] %v243
  %260 = vst [vmem:[#allocation2 + $0x58] sm:$0xff] %v244
  %261 = vst [vmem:[#allocation2 + $0x60] sm:$0xff] %v245
  %262 = vst [vmem:[#allocation2 + $0x68] sm:$0xff] %v246
  %263 = vst [vmem:[#allocation2 + $0x70] sm:$0xff] %v247
  %264 = vst [vmem:[#allocation2 + $0x78] sm:$0xff] %v248
  // Predicated region
  $region26: #{neco_forward.4} parent=0 // pred_check
    %p265 = pneg %p20
  $region27: #{neco_forward.4} parent=0 // pred_check_branch
    %267 = sbr.rel (%p265) target = $region29
  $region28: #{neco_forward.4} parent=0 // pred_region
    %v268 = vld [vmem:[%s2] sm:$0xff]
    %v269 = vld [vmem:[%s2 + $0x8] sm:$0xff]
    %v270 = vld [vmem:[%s2 + $0x10] sm:$0xff]
    %v271 = vld [vmem:[%s2 + $0x18] sm:$0xff]
    %v272 = vld [vmem:[%s2 + $0x20] sm:$0xff]
    %v273 = vld [vmem:[%s2 + $0x28] sm:$0xff]
    %v274 = vld [vmem:[%s2 + $0x30] sm:$0xff]
    %v275 = vld [vmem:[%s2 + $0x38] sm:$0xff]
    %v276 = vld [vmem:[%s2 + $0x40] sm:$0xff]
    %v277 = vld [vmem:[%s2 + $0x48] sm:$0xff]
    %v278 = vld [vmem:[%s2 + $0x50] sm:$0xff]
    %v279 = vld [vmem:[%s2 + $0x58] sm:$0xff]
    %v280 = vld [vmem:[%s2 + $0x60] sm:$0xff]
    %v281 = vld [vmem:[%s2 + $0x68] sm:$0xff]
    %v282 = vld [vmem:[%s2 + $0x70] sm:$0xff]
    %v283 = vld [vmem:[%s2 + $0x78] sm:$0xff]
    %v284 = vld [vmem:[#allocation2] sm:$0xff]
    %v285 = vld [vmem:[#allocation2 + $0x8] sm:$0xff]
    %v286 = vld [vmem:[#allocation2 + $0x10] sm:$0xff]
    %v287 = vld [vmem:[#allocation2 + $0x18] sm:$0xff]
    %v288 = vld [vmem:[#allocation2 + $0x20] sm:$0xff]
    %v289 = vld [vmem:[#allocation2 + $0x28] sm:$0xff]
    %v290 = vld [vmem:[#allocation2 + $0x30] sm:$0xff]
    %v291 = vld [vmem:[#allocation2 + $0x38] sm:$0xff]
    %v292 = vld [vmem:[#allocation2 + $0x40] sm:$0xff]
    %v293 = vld [vmem:[#allocation2 + $0x48] sm:$0xff]
    %v294 = vld [vmem:[#allocation2 + $0x50] sm:$0xff]
    %v295 = vld [vmem:[#allocation2 + $0x58] sm:$0xff]
    %v296 = vld [vmem:[#allocation2 + $0x60] sm:$0xff]
    %v297 = vld [vmem:[#allocation2 + $0x68] sm:$0xff]
    %v298 = vld [vmem:[#allocation2 + $0x70] sm:$0xff]
    %v299 = vld [vmem:[#allocation2 + $0x78] sm:$0xff]
    %301 = vset.pattern.permute.xlu0 0
    %302 = vperm.xlu0 %301, %v268
    %v303 = vpop.permute.xlu0 %302
    %306 = vset.pattern.permute.xlu0 0
    %307 = vperm.xlu0 %306, %v269
    %v308 = vpop.permute.xlu0 %307
    %311 = vset.pattern.permute.xlu0 0
    %312 = vperm.xlu0 %311, %v270
    %v313 = vpop.permute.xlu0 %312
    %316 = vset.pattern.permute.xlu0 0
    %317 = vperm.xlu0 %316, %v271
    %v318 = vpop.permute.xlu0 %317
    %321 = vset.pattern.permute.xlu0 0
    %322 = vperm.xlu0 %321, %v272
    %v323 = vpop.permute.xlu0 %322
    %326 = vset.pattern.permute.xlu0 0
    %327 = vperm.xlu0 %326, %v273
    %v328 = vpop.permute.xlu0 %327
    %331 = vset.pattern.permute.xlu0 0
    %332 = vperm.xlu0 %331, %v274
    %v333 = vpop.permute.xlu0 %332
    %336 = vset.pattern.permute.xlu0 0
    %337 = vperm.xlu0 %336, %v275
    %v338 = vpop.permute.xlu0 %337
    %341 = vset.pattern.permute.xlu0 0
    %342 = vperm.xlu0 %341, %v276
    %v343 = vpop.permute.xlu0 %342
    %346 = vset.pattern.permute.xlu0 0
    %347 = vperm.xlu0 %346, %v277
    %v348 = vpop.permute.xlu0 %347
    %351 = vset.pattern.permute.xlu0 0
    %352 = vperm.xlu0 %351, %v278
    %v353 = vpop.permute.xlu0 %352
    %356 = vset.pattern.permute.xlu0 0
    %357 = vperm.xlu0 %356, %v279
    %v358 = vpop.permute.xlu0 %357
    %361 = vset.pattern.permute.xlu0 0
    %362 = vperm.xlu0 %361, %v280
    %v363 = vpop.permute.xlu0 %362
    %366 = vset.pattern.permute.xlu0 0
    %367 = vperm.xlu0 %366, %v281
    %v368 = vpop.permute.xlu0 %367
    %371 = vset.pattern.permute.xlu0 0
    %372 = vperm.xlu0 %371, %v282
    %v373 = vpop.permute.xlu0 %372
    %376 = vset.pattern.permute.xlu0 0
    %377 = vperm.xlu0 %376, %v283
    %v378 = vpop.permute.xlu0 %377
    %v380 = vmul.f32 %v303, %v284
    %v381 = vmul.f32 %v308, %v285
    %v382 = vmul.f32 %v313, %v286
    %v383 = vmul.f32 %v318, %v287
    %v384 = vmul.f32 %v323, %v288
    %v385 = vmul.f32 %v328, %v289
    %v386 = vmul.f32 %v333, %v290
    %v387 = vmul.f32 %v338, %v291
    %v388 = vmul.f32 %v343, %v292
    %v389 = vmul.f32 %v348, %v293
    %v390 = vmul.f32 %v353, %v294
    %v391 = vmul.f32 %v358, %v295
    %v392 = vmul.f32 %v363, %v296
    %v393 = vmul.f32 %v368, %v297
    %v394 = vmul.f32 %v373, %v298
    %v395 = vmul.f32 %v378, %v299
    %v396 = vld [vmem:[%s3] sm:$0x1]
    %v398 = vperm.slane %v396, 0
    %v400 = vadd.f32 %v380, %v398
    %v401 = vadd.f32 %v381, %v398
    %v402 = vadd.f32 %v382, %v398
    %v403 = vadd.f32 %v383, %v398
    %v404 = vadd.f32 %v384, %v398
    %v405 = vadd.f32 %v385, %v398
    %v406 = vadd.f32 %v386, %v398
    %v407 = vadd.f32 %v387, %v398
    %v408 = vadd.f32 %v388, %v398
    %v409 = vadd.f32 %v389, %v398
    %v410 = vadd.f32 %v390, %v398
    %v411 = vadd.f32 %v391, %v398
    %v412 = vadd.f32 %v392, %v398
    %v413 = vadd.f32 %v393, %v398
    %v414 = vadd.f32 %v394, %v398
    %v415 = vadd.f32 %v395, %v398
    %v416 = vmax.f32 %v400, 0.0
    %v417 = vmax.f32 %v401, 0.0
    %v418 = vmax.f32 %v402, 0.0
    %v419 = vmax.f32 %v403, 0.0
    %v420 = vmax.f32 %v404, 0.0
    %v421 = vmax.f32 %v405, 0.0
    %v422 = vmax.f32 %v406, 0.0
    %v423 = vmax.f32 %v407, 0.0
    %v424 = vmax.f32 %v408, 0.0
    %v425 = vmax.f32 %v409, 0.0
    %v426 = vmax.f32 %v410, 0.0
    %v427 = vmax.f32 %v411, 0.0
    %v428 = vmax.f32 %v412, 0.0
    %v429 = vmax.f32 %v413, 0.0
    %v430 = vmax.f32 %v414, 0.0
    %v431 = vmax.f32 %v415, 0.0
    %v432 = vpack.c.bf16 %v417, %v416
    %v433 = vpack.c.bf16 %v419, %v418
    %v434 = vpack.c.bf16 %v421, %v420
    %v435 = vpack.c.bf16 %v423, %v422
    %v436 = vpack.c.bf16 %v425, %v424
    %v437 = vpack.c.bf16 %v427, %v426
    %v438 = vpack.c.bf16 %v429, %v428
    %v439 = vpack.c.bf16 %v431, %v430
    %v440 = vld [vmem:[%s4] sm:$0xf]
    %v441 = vld [vmem:[%s4 + $0x4] sm:$0xf]
    %v442 = vld [vmem:[%s4 + $0x8] sm:$0xf]
    %v443 = vld [vmem:[%s4 + $0xc] sm:$0xf]
    %v444 = vld [vmem:[%s4 + $0x10] sm:$0xf]
    %v445 = vld [vmem:[%s4 + $0x14] sm:$0xf]
    %v446 = vld [vmem:[%s4 + $0x18] sm:$0xf]
    %v447 = vld [vmem:[%s4 + $0x1c] sm:$0xf]
    %v448 = vld [vmem:[%s4 + $0x20] sm:$0xf]
    %v449 = vld [vmem:[%s4 + $0x24] sm:$0xf]
    %v450 = vld [vmem:[%s4 + $0x28] sm:$0xf]
    %v451 = vld [vmem:[%s4 + $0x2c] sm:$0xf]
    %v452 = vld [vmem:[%s4 + $0x30] sm:$0xf]
    %v453 = vld [vmem:[%s4 + $0x34] sm:$0xf]
    %v454 = vld [vmem:[%s4 + $0x38] sm:$0xf]
    %v455 = vld [vmem:[%s4 + $0x3c] sm:$0xf]
    %v472 = vunpack.c.l.b16 %v440
    %v473 = vunpack.c.l.b16 %v441
    %v474 = vunpack.c.l.b16 %v442
    %v475 = vunpack.c.l.b16 %v443
    %v476 = vunpack.c.l.b16 %v444
    %v477 = vunpack.c.l.b16 %v445
    %v478 = vunpack.c.l.b16 %v446
    %v479 = vunpack.c.l.b16 %v447
    %v480 = vunpack.c.l.b16 %v448
    %v481 = vunpack.c.l.b16 %v449
    %v482 = vunpack.c.l.b16 %v450
    %v483 = vunpack.c.l.b16 %v451
    %v484 = vunpack.c.l.b16 %v452
    %v485 = vunpack.c.l.b16 %v453
    %v486 = vunpack.c.l.b16 %v454
    %v487 = vunpack.c.l.b16 %v455
    %v488 = vpack.c.b16 %v473, %v472
    %v489 = vpack.c.b16 %v475, %v474
    %v490 = vpack.c.b16 %v477, %v476
    %v491 = vpack.c.b16 %v479, %v478
    %v492 = vpack.c.b16 %v481, %v480
    %v493 = vpack.c.b16 %v483, %v482
    %v494 = vpack.c.b16 %v485, %v484
    %v495 = vpack.c.b16 %v487, %v486
    %504 = vmatpush.bf16.msra.mxu0 %v495
    %505 = vmatpush.bf16.msra.mxu0 %v494
    %506 = vmatpush.bf16.msra.mxu0 %v493
    %507 = vmatpush.bf16.msra.mxu0 %v492
    %508 = vmatpush.bf16.msra.mxu0 %v491
    %509 = vmatpush.bf16.msra.mxu0 %v490
    %510 = vmatpush.bf16.msra.mxu0 %v489
    %511 = vmatpush.bf16.msra.mxu0 %v488
    %512 = vmatmul.bf16.gmra.mxu0 %v432
    %v513 = vpop.f32.mrf.mxu0
    %v514 = vadd.f32 0.0, %v513
    %v515 = vpop.f32.mrf.mxu0
    %v516 = vadd.f32 0.0, %v515
    %517 = vmatmul.bf16.gmra.mxu0 %v433
    %v518 = vpop.f32.mrf.mxu0
    %v519 = vadd.f32 0.0, %v518
    %v520 = vpop.f32.mrf.mxu0
    %v521 = vadd.f32 0.0, %v520
    %522 = vmatmul.bf16.gmra.mxu0 %v434
    %v523 = vpop.f32.mrf.mxu0
    %v524 = vadd.f32 0.0, %v523
    %v525 = vpop.f32.mrf.mxu0
    %v526 = vadd.f32 0.0, %v525
    %527 = vmatmul.bf16.gmra.mxu0 %v435
    %v528 = vpop.f32.mrf.mxu0
    %v529 = vadd.f32 0.0, %v528
    %v530 = vpop.f32.mrf.mxu0
    %v531 = vadd.f32 0.0, %v530
    %532 = vmatmul.bf16.gmra.mxu0 %v436
    %v533 = vpop.f32.mrf.mxu0
    %v534 = vadd.f32 0.0, %v533
    %v535 = vpop.f32.mrf.mxu0
    %v536 = vadd.f32 0.0, %v535
    %537 = vmatmul.bf16.gmra.mxu0 %v437
    %v538 = vpop.f32.mrf.mxu0
    %v539 = vadd.f32 0.0, %v538
    %v540 = vpop.f32.mrf.mxu0
    %v541 = vadd.f32 0.0, %v540
    %542 = vmatmul.bf16.gmra.mxu0 %v438
    %v543 = vpop.f32.mrf.mxu0
    %v544 = vadd.f32 0.0, %v543
    %v545 = vpop.f32.mrf.mxu0
    %v546 = vadd.f32 0.0, %v545
    %547 = vmatmul.bf16.gmra.mxu0 %v439
    %v548 = vpop.f32.mrf.mxu0
    %v549 = vadd.f32 0.0, %v548
    %v550 = vpop.f32.mrf.mxu0
    %v551 = vadd.f32 0.0, %v550
    %552 = vdwg.mxu0
    %v553 = vmul.f32 %v303, %v514
    %v554 = vmul.f32 %v308, %v516
    %v555 = vmul.f32 %v313, %v519
    %v556 = vmul.f32 %v318, %v521
    %v557 = vmul.f32 %v323, %v524
    %v558 = vmul.f32 %v328, %v526
    %v559 = vmul.f32 %v333, %v529
    %v560 = vmul.f32 %v338, %v531
    %v561 = vmul.f32 %v343, %v534
    %v562 = vmul.f32 %v348, %v536
    %v563 = vmul.f32 %v353, %v539
    %v564 = vmul.f32 %v358, %v541
    %v565 = vmul.f32 %v363, %v544
    %v566 = vmul.f32 %v368, %v546
    %v567 = vmul.f32 %v373, %v549
    %v568 = vmul.f32 %v378, %v551
    %v569 = vpack.c.bf16 %v553, %v553
    %v570 = vpack.c.bf16 %v554, %v554
    %v571 = vpack.c.bf16 %v555, %v555
    %v572 = vpack.c.bf16 %v556, %v556
    %v573 = vpack.c.bf16 %v557, %v557
    %v574 = vpack.c.bf16 %v558, %v558
    %v575 = vpack.c.bf16 %v559, %v559
    %v576 = vpack.c.bf16 %v560, %v560
    %v577 = vpack.c.bf16 %v561, %v561
    %v578 = vpack.c.bf16 %v562, %v562
    %v579 = vpack.c.bf16 %v563, %v563
    %v580 = vpack.c.bf16 %v564, %v564
    %v581 = vpack.c.bf16 %v565, %v565
    %v582 = vpack.c.bf16 %v566, %v566
    %v583 = vpack.c.bf16 %v567, %v567
    %v584 = vpack.c.bf16 %v568, %v568
    %585 = vst [vmem:[%s5] sm:$0xf] %v569
    %586 = vst [vmem:[%s5 + $0x4] sm:$0xf] %v570
    %587 = vst [vmem:[%s5 + $0x8] sm:$0xf] %v571
    %588 = vst [vmem:[%s5 + $0xc] sm:$0xf] %v572
    %589 = vst [vmem:[%s5 + $0x10] sm:$0xf] %v573
    %590 = vst [vmem:[%s5 + $0x14] sm:$0xf] %v574
    %591 = vst [vmem:[%s5 + $0x18] sm:$0xf] %v575
    %592 = vst [vmem:[%s5 + $0x1c] sm:$0xf] %v576
    %593 = vst [vmem:[%s5 + $0x20] sm:$0xf] %v577
    %594 = vst [vmem:[%s5 + $0x24] sm:$0xf] %v578
    %595 = vst [vmem:[%s5 + $0x28] sm:$0xf] %v579
    %596 = vst [vmem:[%s5 + $0x2c] sm:$0xf] %v580
    %597 = vst [vmem:[%s5 + $0x30] sm:$0xf] %v581
    %598 = vst [vmem:[%s5 + $0x34] sm:$0xf] %v582
    %599 = vst [vmem:[%s5 + $0x38] sm:$0xf] %v583
    %600 = vst [vmem:[%s5 + $0x3c] sm:$0xf] %v584
  $region29: #{neco_forward.4} parent=0 // pred_fallthru
    _
  // Predicated region
  $region30: #{neco_forward.4} parent=0 // pred_check
    _
  $region31: #{neco_forward.4} parent=0 // pred_check_branch
    %602 = sbr.rel (0) target = $region33
  $region32: #{neco_forward.4} parent=0 // pred_region
    _
  $region33: #{neco_forward.4} parent=0 // pred_fallthru
    _
  // Predicated region
  $region34: #{neco_forward.4} parent=0 // pred_check
    _
  $region35: #{neco_forward.4} parent=0 // pred_check_branch
    %604 = sbr.rel (0) target = $region37
  $region36: #{neco_forward.4} parent=0 // pred_region
    _
  $region37: #{neco_forward.4} parent=0 // pred_fallthru
    _

// kernel: neco_forward.5
$region0: #{neco_forward.5}
  #allocation0 [shape = 'u32[]', space=smem, size = 0x4, offset = 0x4, fixed_abs, tag = 'smem constant byte address 0x4 - core index']
  #allocation1 [shape = 'u32[72,128]{1,0:T(1,128)}', space=vmem, size = 0x9000, scoped, tag = 'internal scratch']
  #allocation2 [shape = 'f32[128,128]{1,0:T(8,128)}', space=vmem, size = 0x10000, scoped, tag = 'scratch operand']
  %s0 = inlined_call_operand.vmem [shape: bf16[128,128], index: 0, kind: input, shape index: {}]
  %s1 = inlined_call_operand.vmem [shape: bf16[128,128], index: 1, kind: input, shape index: {}]
  %s2 = inlined_call_operand.vmem [shape: f32[128,1], index: 2, kind: input, shape index: {}]
  %s3 = inlined_call_operand.vmem [shape: f32[1,128], index: 3, kind: input, shape index: {}]
  %s4 = inlined_call_operand.vmem [shape: f32[128,128], index: 4, kind: output, shape index: {}]
  %s5 = sld [smem:[#allocation0]]
  $region34: #{neco_forward.5} parent=0
    _
  %s7 = ssub.s32 1, %s5
  %s8 = scalar_select 0, %s7, %s5
  // Predicated region
  $region2: #{neco_forward.5} parent=0 // pred_check
    _
  $region3: #{neco_forward.5} parent=0 // pred_check_branch
    %10 = sbr.rel (0) target = $region5
  $region4: #{neco_forward.5} parent=0 // pred_region
    _
  $region5: #{neco_forward.5} parent=0 // pred_fallthru
    _
  // Predicated region
  $region6: #{neco_forward.5} parent=0 // pred_check
    _
  $region7: #{neco_forward.5} parent=0 // pred_check_branch
    %12 = sbr.rel (0) target = $region9
  $region8: #{neco_forward.5} parent=0 // pred_region
    _
  $region9: #{neco_forward.5} parent=0 // pred_fallthru
    _
  // Predicated region
  $region10: #{neco_forward.5} parent=0 // pred_check
    _
  $region11: #{neco_forward.5} parent=0 // pred_check_branch
    %14 = sbr.rel (0) target = $region13
  $region12: #{neco_forward.5} parent=0 // pred_region
    _
  $region13: #{neco_forward.5} parent=0 // pred_fallthru
    _
  // Predicated region
  $region14: #{neco_forward.5} parent=0 // pred_check
    _
  $region15: #{neco_forward.5} parent=0 // pred_check_branch
    %16 = sbr.rel (0) target = $region17
  $region16: #{neco_forward.5} parent=0 // pred_region
    _
  $region17: #{neco_forward.5} parent=0 // pred_fallthru
    _
  %p17 = scmp.eq.s32.totalorder 0, 0
  // Predicated region
  $region18: #{neco_forward.5} parent=0 // pred_check
    %p18 = pneg %p17
  $region19: #{neco_forward.5} parent=0 // pred_check_branch
    %20 = sbr.rel (%p18) target = $region21
  $region20: #{neco_forward.5} parent=0 // pred_region
    %21 = vst [vmem:[#allocation2] sm:$0xff] 0.0
    %22 = vst [vmem:[#allocation2 + $0x8] sm:$0xff] 0.0
    %23 = vst [vmem:[#allocation2 + $0x10] sm:$0xff] 0.0
    %24 = vst [vmem:[#allocation2 + $0x18] sm:$0xff] 0.0
    %25 = vst [vmem:[#allocation2 + $0x20] sm:$0xff] 0.0
    %26 = vst [vmem:[#allocation2 + $0x28] sm:$0xff] 0.0
    %27 = vst [vmem:[#allocation2 + $0x30] sm:$0xff] 0.0
    %28 = vst [vmem:[#allocation2 + $0x38] sm:$0xff] 0.0
    %29 = vst [vmem:[#allocation2 + $0x40] sm:$0xff] 0.0
    %30 = vst [vmem:[#allocation2 + $0x48] sm:$0xff] 0.0
    %31 = vst [vmem:[#allocation2 + $0x50] sm:$0xff] 0.0
    %32 = vst [vmem:[#allocation2 + $0x58] sm:$0xff] 0.0
    %33 = vst [vmem:[#allocation2 + $0x60] sm:$0xff] 0.0
    %34 = vst [vmem:[#allocation2 + $0x68] sm:$0xff] 0.0
    %35 = vst [vmem:[#allocation2 + $0x70] sm:$0xff] 0.0
    %36 = vst [vmem:[#allocation2 + $0x78] sm:$0xff] 0.0
  $region21: #{neco_forward.5} parent=0 // pred_fallthru
    _
  %v37 = vld [vmem:[#allocation2] sm:$0xff]
  %v38 = vld [vmem:[#allocation2 + $0x8] sm:$0xff]
  %v39 = vld [vmem:[#allocation2 + $0x10] sm:$0xff]
  %v40 = vld [vmem:[#allocation2 + $0x18] sm:$0xff]
  %v41 = vld [vmem:[#allocation2 + $0x20] sm:$0xff]
  %v42 = vld [vmem:[#allocation2 + $0x28] sm:$0xff]
  %v43 = vld [vmem:[#allocation2 + $0x30] sm:$0xff]
  %v44 = vld [vmem:[#allocation2 + $0x38] sm:$0xff]
  %v45 = vld [vmem:[#allocation2 + $0x40] sm:$0xff]
  %v46 = vld [vmem:[#allocation2 + $0x48] sm:$0xff]
  %v47 = vld [vmem:[#allocation2 + $0x50] sm:$0xff]
  %v48 = vld [vmem:[#allocation2 + $0x58] sm:$0xff]
  %v49 = vld [vmem:[#allocation2 + $0x60] sm:$0xff]
  %v50 = vld [vmem:[#allocation2 + $0x68] sm:$0xff]
  %v51 = vld [vmem:[#allocation2 + $0x70] sm:$0xff]
  %v52 = vld [vmem:[#allocation2 + $0x78] sm:$0xff]
  %v53 = vld [vmem:[%s0] sm:$0xf]
  %v54 = vld [vmem:[%s0 + $0x4] sm:$0xf]
  %v55 = vld [vmem:[%s0 + $0x8] sm:$0xf]
  %v56 = vld [vmem:[%s0 + $0xc] sm:$0xf]
  %v57 = vld [vmem:[%s0 + $0x10] sm:$0xf]
  %v58 = vld [vmem:[%s0 + $0x14] sm:$0xf]
  %v59 = vld [vmem:[%s0 + $0x18] sm:$0xf]
  %v60 = vld [vmem:[%s0 + $0x1c] sm:$0xf]
  %v61 = vld [vmem:[%s0 + $0x20] sm:$0xf]
  %v62 = vld [vmem:[%s0 + $0x24] sm:$0xf]
  %v63 = vld [vmem:[%s0 + $0x28] sm:$0xf]
  %v64 = vld [vmem:[%s0 + $0x2c] sm:$0xf]
  %v65 = vld [vmem:[%s0 + $0x30] sm:$0xf]
  %v66 = vld [vmem:[%s0 + $0x34] sm:$0xf]
  %v67 = vld [vmem:[%s0 + $0x38] sm:$0xf]
  %v68 = vld [vmem:[%s0 + $0x3c] sm:$0xf]
  %v69 = vld [vmem:[%s1] sm:$0xf]
  %v70 = vld [vmem:[%s1 + $0x4] sm:$0xf]
  %v71 = vld [vmem:[%s1 + $0x8] sm:$0xf]
  %v72 = vld [vmem:[%s1 + $0xc] sm:$0xf]
  %v73 = vld [vmem:[%s1 + $0x10] sm:$0xf]
  %v74 = vld [vmem:[%s1 + $0x14] sm:$0xf]
  %v75 = vld [vmem:[%s1 + $0x18] sm:$0xf]
  %v76 = vld [vmem:[%s1 + $0x1c] sm:$0xf]
  %v77 = vld [vmem:[%s1 + $0x20] sm:$0xf]
  %v78 = vld [vmem:[%s1 + $0x24] sm:$0xf]
  %v79 = vld [vmem:[%s1 + $0x28] sm:$0xf]
  %v80 = vld [vmem:[%s1 + $0x2c] sm:$0xf]
  %v81 = vld [vmem:[%s1 + $0x30] sm:$0xf]
  %v82 = vld [vmem:[%s1 + $0x34] sm:$0xf]
  %v83 = vld [vmem:[%s1 + $0x38] sm:$0xf]
  %v84 = vld [vmem:[%s1 + $0x3c] sm:$0xf]
  %v101 = vunpack.c.l.b16 %v53
  %v102 = vunpack.c.l.b16 %v54
  %v103 = vunpack.c.l.b16 %v55
  %v104 = vunpack.c.l.b16 %v56
  %v105 = vunpack.c.l.b16 %v57
  %v106 = vunpack.c.l.b16 %v58
  %v107 = vunpack.c.l.b16 %v59
  %v108 = vunpack.c.l.b16 %v60
  %v109 = vunpack.c.l.b16 %v61
  %v110 = vunpack.c.l.b16 %v62
  %v111 = vunpack.c.l.b16 %v63
  %v112 = vunpack.c.l.b16 %v64
  %v113 = vunpack.c.l.b16 %v65
  %v114 = vunpack.c.l.b16 %v66
  %v115 = vunpack.c.l.b16 %v67
  %v116 = vunpack.c.l.b16 %v68
  %v117 = vpack.c.b16 %v102, %v101
  %v118 = vpack.c.b16 %v104, %v103
  %v119 = vpack.c.b16 %v106, %v105
  %v120 = vpack.c.b16 %v108, %v107
  %v121 = vpack.c.b16 %v110, %v109
  %v122 = vpack.c.b16 %v112, %v111
  %v123 = vpack.c.b16 %v114, %v113
  %v124 = vpack.c.b16 %v116, %v115
  %v149 = vunpack.c.l.b16 %v69
  %v150 = vunpack.c.l.b16 %v70
  %v151 = vunpack.c.l.b16 %v71
  %v152 = vunpack.c.l.b16 %v72
  %v153 = vunpack.c.l.b16 %v73
  %v154 = vunpack.c.l.b16 %v74
  %v155 = vunpack.c.l.b16 %v75
  %v156 = vunpack.c.l.b16 %v76
  %v157 = vunpack.c.l.b16 %v77
  %v158 = vunpack.c.l.b16 %v78
  %v159 = vunpack.c.l.b16 %v79
  %v160 = vunpack.c.l.b16 %v80
  %v161 = vunpack.c.l.b16 %v81
  %v162 = vunpack.c.l.b16 %v82
  %v163 = vunpack.c.l.b16 %v83
  %v164 = vunpack.c.l.b16 %v84
  %v165 = vpack.c.b16 %v150, %v149
  %v166 = vpack.c.b16 %v152, %v151
  %v167 = vpack.c.b16 %v154, %v153
  %v168 = vpack.c.b16 %v156, %v155
  %v169 = vpack.c.b16 %v158, %v157
  %v170 = vpack.c.b16 %v160, %v159
  %v171 = vpack.c.b16 %v162, %v161
  %v172 = vpack.c.b16 %v164, %v163
  %181 = vmatpush.bf16.msra.mxu0 %v172
  %182 = vmatpush.bf16.msra.mxu0 %v171
  %183 = vmatpush.bf16.msra.mxu0 %v170
  %184 = vmatpush.bf16.msra.mxu0 %v169
  %185 = vmatpush.bf16.msra.mxu0 %v168
  %186 = vmatpush.bf16.msra.mxu0 %v167
  %187 = vmatpush.bf16.msra.mxu0 %v166
  %188 = vmatpush.bf16.msra.mxu0 %v165
  %189 = vmatmul.bf16.gmra.mxu0 %v117
  %v190 = vpop.f32.mrf.mxu0
  %v191 = vadd.f32 0.0, %v190
  %v192 = vpop.f32.mrf.mxu0
  %v193 = vadd.f32 0.0, %v192
  %194 = vmatmul.bf16.gmra.mxu0 %v118
  %v195 = vpop.f32.mrf.mxu0
  %v196 = vadd.f32 0.0, %v195
  %v197 = vpop.f32.mrf.mxu0
  %v198 = vadd.f32 0.0, %v197
  %199 = vmatmul.bf16.gmra.mxu0 %v119
  %v200 = vpop.f32.mrf.mxu0
  %v201 = vadd.f32 0.0, %v200
  %v202 = vpop.f32.mrf.mxu0
  %v203 = vadd.f32 0.0, %v202
  %204 = vmatmul.bf16.gmra.mxu0 %v120
  %v205 = vpop.f32.mrf.mxu0
  %v206 = vadd.f32 0.0, %v205
  %v207 = vpop.f32.mrf.mxu0
  %v208 = vadd.f32 0.0, %v207
  %209 = vmatmul.bf16.gmra.mxu0 %v121
  %v210 = vpop.f32.mrf.mxu0
  %v211 = vadd.f32 0.0, %v210
  %v212 = vpop.f32.mrf.mxu0
  %v213 = vadd.f32 0.0, %v212
  %214 = vmatmul.bf16.gmra.mxu0 %v122
  %v215 = vpop.f32.mrf.mxu0
  %v216 = vadd.f32 0.0, %v215
  %v217 = vpop.f32.mrf.mxu0
  %v218 = vadd.f32 0.0, %v217
  %219 = vmatmul.bf16.gmra.mxu0 %v123
  %v220 = vpop.f32.mrf.mxu0
  %v221 = vadd.f32 0.0, %v220
  %v222 = vpop.f32.mrf.mxu0
  %v223 = vadd.f32 0.0, %v222
  %224 = vmatmul.bf16.gmra.mxu0 %v124
  %v225 = vpop.f32.mrf.mxu0
  %v226 = vadd.f32 0.0, %v225
  %v227 = vpop.f32.mrf.mxu0
  %v228 = vadd.f32 0.0, %v227
  %229 = vdwg.mxu0
  %v230 = vadd.f32 %v37, %v191
  %v231 = vadd.f32 %v38, %v193
  %v232 = vadd.f32 %v39, %v196
  %v233 = vadd.f32 %v40, %v198
  %v234 = vadd.f32 %v41, %v201
  %v235 = vadd.f32 %v42, %v203
  %v236 = vadd.f32 %v43, %v206
  %v237 = vadd.f32 %v44, %v208
  %v238 = vadd.f32 %v45, %v211
  %v239 = vadd.f32 %v46, %v213
  %v240 = vadd.f32 %v47, %v216
  %v241 = vadd.f32 %v48, %v218
  %v242 = vadd.f32 %v49, %v221
  %v243 = vadd.f32 %v50, %v223
  %v244 = vadd.f32 %v51, %v226
  %v245 = vadd.f32 %v52, %v228
  %246 = vst [vmem:[#allocation2] sm:$0xff] %v230
  %247 = vst [vmem:[#allocation2 + $0x8] sm:$0xff] %v231
  %248 = vst [vmem:[#allocation2 + $0x10] sm:$0xff] %v232
  %249 = vst [vmem:[#allocation2 + $0x18] sm:$0xff] %v233
  %250 = vst [vmem:[#allocation2 + $0x20] sm:$0xff] %v234
  %251 = vst [vmem:[#allocation2 + $0x28] sm:$0xff] %v235
  %252 = vst [vmem:[#allocation2 + $0x30] sm:$0xff] %v236
  %253 = vst [vmem:[#allocation2 + $0x38] sm:$0xff] %v237
  %254 = vst [vmem:[#allocation2 + $0x40] sm:$0xff] %v238
  %255 = vst [vmem:[#allocation2 + $0x48] sm:$0xff] %v239
  %256 = vst [vmem:[#allocation2 + $0x50] sm:$0xff] %v240
  %257 = vst [vmem:[#allocation2 + $0x58] sm:$0xff] %v241
  %258 = vst [vmem:[#allocation2 + $0x60] sm:$0xff] %v242
  %259 = vst [vmem:[#allocation2 + $0x68] sm:$0xff] %v243
  %260 = vst [vmem:[#allocation2 + $0x70] sm:$0xff] %v244
  %261 = vst [vmem:[#allocation2 + $0x78] sm:$0xff] %v245
  // Predicated region
  $region22: #{neco_forward.5} parent=0 // pred_check
    %p262 = pneg %p17
  $region23: #{neco_forward.5} parent=0 // pred_check_branch
    %264 = sbr.rel (%p262) target = $region25
  $region24: #{neco_forward.5} parent=0 // pred_region
    %v265 = vld [vmem:[%s2] sm:$0xff]
    %v266 = vld [vmem:[%s2 + $0x8] sm:$0xff]
    %v267 = vld [vmem:[%s2 + $0x10] sm:$0xff]
    %v268 = vld [vmem:[%s2 + $0x18] sm:$0xff]
    %v269 = vld [vmem:[%s2 + $0x20] sm:$0xff]
    %v270 = vld [vmem:[%s2 + $0x28] sm:$0xff]
    %v271 = vld [vmem:[%s2 + $0x30] sm:$0xff]
    %v272 = vld [vmem:[%s2 + $0x38] sm:$0xff]
    %v273 = vld [vmem:[%s2 + $0x40] sm:$0xff]
    %v274 = vld [vmem:[%s2 + $0x48] sm:$0xff]
    %v275 = vld [vmem:[%s2 + $0x50] sm:$0xff]
    %v276 = vld [vmem:[%s2 + $0x58] sm:$0xff]
    %v277 = vld [vmem:[%s2 + $0x60] sm:$0xff]
    %v278 = vld [vmem:[%s2 + $0x68] sm:$0xff]
    %v279 = vld [vmem:[%s2 + $0x70] sm:$0xff]
    %v280 = vld [vmem:[%s2 + $0x78] sm:$0xff]
    %v281 = vld [vmem:[#allocation2] sm:$0xff]
    %v282 = vld [vmem:[#allocation2 + $0x8] sm:$0xff]
    %v283 = vld [vmem:[#allocation2 + $0x10] sm:$0xff]
    %v284 = vld [vmem:[#allocation2 + $0x18] sm:$0xff]
    %v285 = vld [vmem:[#allocation2 + $0x20] sm:$0xff]
    %v286 = vld [vmem:[#allocation2 + $0x28] sm:$0xff]
    %v287 = vld [vmem:[#allocation2 + $0x30] sm:$0xff]
    %v288 = vld [vmem:[#allocation2 + $0x38] sm:$0xff]
    %v289 = vld [vmem:[#allocation2 + $0x40] sm:$0xff]
    %v290 = vld [vmem:[#allocation2 + $0x48] sm:$0xff]
    %v291 = vld [vmem:[#allocation2 + $0x50] sm:$0xff]
    %v292 = vld [vmem:[#allocation2 + $0x58] sm:$0xff]
    %v293 = vld [vmem:[#allocation2 + $0x60] sm:$0xff]
    %v294 = vld [vmem:[#allocation2 + $0x68] sm:$0xff]
    %v295 = vld [vmem:[#allocation2 + $0x70] sm:$0xff]
    %v296 = vld [vmem:[#allocation2 + $0x78] sm:$0xff]
    %298 = vset.pattern.permute.xlu0 0
    %299 = vperm.xlu0 %298, %v265
    %v300 = vpop.permute.xlu0 %299
    %303 = vset.pattern.permute.xlu0 0
    %304 = vperm.xlu0 %303, %v266
    %v305 = vpop.permute.xlu0 %304
    %308 = vset.pattern.permute.xlu0 0
    %309 = vperm.xlu0 %308, %v267
    %v310 = vpop.permute.xlu0 %309
    %313 = vset.pattern.permute.xlu0 0
    %314 = vperm.xlu0 %313, %v268
    %v315 = vpop.permute.xlu0 %314
    %318 = vset.pattern.permute.xlu0 0
    %319 = vperm.xlu0 %318, %v269
    %v320 = vpop.permute.xlu0 %319
    %323 = vset.pattern.permute.xlu0 0
    %324 = vperm.xlu0 %323, %v270
    %v325 = vpop.permute.xlu0 %324
    %328 = vset.pattern.permute.xlu0 0
    %329 = vperm.xlu0 %328, %v271
    %v330 = vpop.permute.xlu0 %329
    %333 = vset.pattern.permute.xlu0 0
    %334 = vperm.xlu0 %333, %v272
    %v335 = vpop.permute.xlu0 %334
    %338 = vset.pattern.permute.xlu0 0
    %339 = vperm.xlu0 %338, %v273
    %v340 = vpop.permute.xlu0 %339
    %343 = vset.pattern.permute.xlu0 0
    %344 = vperm.xlu0 %343, %v274
    %v345 = vpop.permute.xlu0 %344
    %348 = vset.pattern.permute.xlu0 0
    %349 = vperm.xlu0 %348, %v275
    %v350 = vpop.permute.xlu0 %349
    %353 = vset.pattern.permute.xlu0 0
    %354 = vperm.xlu0 %353, %v276
    %v355 = vpop.permute.xlu0 %354
    %358 = vset.pattern.permute.xlu0 0
    %359 = vperm.xlu0 %358, %v277
    %v360 = vpop.permute.xlu0 %359
    %363 = vset.pattern.permute.xlu0 0
    %364 = vperm.xlu0 %363, %v278
    %v365 = vpop.permute.xlu0 %364
    %368 = vset.pattern.permute.xlu0 0
    %369 = vperm.xlu0 %368, %v279
    %v370 = vpop.permute.xlu0 %369
    %373 = vset.pattern.permute.xlu0 0
    %374 = vperm.xlu0 %373, %v280
    %v375 = vpop.permute.xlu0 %374
    %v377 = vmul.f32 %v300, %v281
    %v378 = vmul.f32 %v305, %v282
    %v379 = vmul.f32 %v310, %v283
    %v380 = vmul.f32 %v315, %v284
    %v381 = vmul.f32 %v320, %v285
    %v382 = vmul.f32 %v325, %v286
    %v383 = vmul.f32 %v330, %v287
    %v384 = vmul.f32 %v335, %v288
    %v385 = vmul.f32 %v340, %v289
    %v386 = vmul.f32 %v345, %v290
    %v387 = vmul.f32 %v350, %v291
    %v388 = vmul.f32 %v355, %v292
    %v389 = vmul.f32 %v360, %v293
    %v390 = vmul.f32 %v365, %v294
    %v391 = vmul.f32 %v370, %v295
    %v392 = vmul.f32 %v375, %v296
    %v393 = vld [vmem:[%s3] sm:$0x1]
    %v395 = vperm.slane %v393, 0
    %v397 = vadd.f32 %v377, %v395
    %v398 = vadd.f32 %v378, %v395
    %v399 = vadd.f32 %v379, %v395
    %v400 = vadd.f32 %v380, %v395
    %v401 = vadd.f32 %v381, %v395
    %v402 = vadd.f32 %v382, %v395
    %v403 = vadd.f32 %v383, %v395
    %v404 = vadd.f32 %v384, %v395
    %v405 = vadd.f32 %v385, %v395
    %v406 = vadd.f32 %v386, %v395
    %v407 = vadd.f32 %v387, %v395
    %v408 = vadd.f32 %v388, %v395
    %v409 = vadd.f32 %v389, %v395
    %v410 = vadd.f32 %v390, %v395
    %v411 = vadd.f32 %v391, %v395
    %v412 = vadd.f32 %v392, %v395
    %413 = vst [vmem:[%s4] sm:$0xff] %v397
    %414 = vst [vmem:[%s4 + $0x8] sm:$0xff] %v398
    %415 = vst [vmem:[%s4 + $0x10] sm:$0xff] %v399
    %416 = vst [vmem:[%s4 + $0x18] sm:$0xff] %v400
    %417 = vst [vmem:[%s4 + $0x20] sm:$0xff] %v401
    %418 = vst [vmem:[%s4 + $0x28] sm:$0xff] %v402
    %419 = vst [vmem:[%s4 + $0x30] sm:$0xff] %v403
    %420 = vst [vmem:[%s4 + $0x38] sm:$0xff] %v404
    %421 = vst [vmem:[%s4 + $0x40] sm:$0xff] %v405
    %422 = vst [vmem:[%s4 + $0x48] sm:$0xff] %v406
    %423 = vst [vmem:[%s4 + $0x50] sm:$0xff] %v407
    %424 = vst [vmem:[%s4 + $0x58] sm:$0xff] %v408
    %425 = vst [vmem:[%s4 + $0x60] sm:$0xff] %v409
    %426 = vst [vmem:[%s4 + $0x68] sm:$0xff] %v410
    %427 = vst [vmem:[%s4 + $0x70] sm:$0xff] %v411
    %428 = vst [vmem:[%s4 + $0x78] sm:$0xff] %v412
  $region25: #{neco_forward.5} parent=0 // pred_fallthru
    _
  // Predicated region
  $region26: #{neco_forward.5} parent=0 // pred_check
    _
  $region27: #{neco_forward.5} parent=0 // pred_check_branch
    %430 = sbr.rel (0) target = $region29
  $region28: #{neco_forward.5} parent=0 // pred_region
    _
  $region29: #{neco_forward.5} parent=0 // pred_fallthru
    _
  // Predicated region
  $region30: #{neco_forward.5} parent=0 // pred_check
    _
  $region31: #{neco_forward.5} parent=0 // pred_check_branch
    %432 = sbr.rel (0) target = $region33
  $region32: #{neco_forward.5} parent=0 // pred_region
    _
  $region33: #{neco_forward.5} parent=0 // pred_fallthru
    _

</llo_original>
